<compile_context>
chip_gen: v5e
topology: v5e:2x2
jax: 0.10.0
libtpu: 0.0.40
codegen_flags: <defaults>
</compile_context>

<pallas_src>
import jax
import jax.numpy as jnp
from jax import lax
from jax.experimental import pallas as pl
from jax.experimental.pallas import tpu as pltpu

# ----------------------------- model dims -----------------------------------
B, S, C = 2, 8, 16            # batch, seq_len, candidate_size
BP = 8                        # batch padded to one sublane tile
NUM_LOC, NUM_TIME = 100, 48   # location / time-slot vocab sizes
LOC_EMB, TIME_EMB = 16, 8
HID = 32                      # GRU hidden size
FC_HID = 32                   # FC hidden size of each scoring head
DIS_WEIGHT = 0.3              # config['dis_weight'] -> init of w1

VOCAB = NUM_LOC + NUM_TIME            # combined gather table rows (148)
TOT_ROWS = S * BP + BP + B * C + S * BP   # trace_loc | des | cand | trace_time = 168


# --------------------------- fused Pallas kernel -----------------------------
def generator_kernel(scal_ref,          # SMEM (3,): [w1, bg2, bh2]
                     idx_ref,           # (168, 1) int32 gather indices
                     len_ref,           # (8, 1)   f32 per-batch valid length
                     dis_ref,           # (B, C)   f32 candidate distances
                     emb_ref,           # (148, 16) bf16 [loc_emb ; time_emb(pad)]
                     gruw_ref,          # (56, 96) bf16 [w_ih_loc; w_ih_time; w_hh]
                     headw_ref,         # (64, 64) bf16 [w1_h|0 ; wg1_des|wh1_des ; wg1_cand|wh1_cand]
                     fb_ref,            # (5, 96)  f32  [b_ih_eff; b_hh_n; w_dis; b1; w2]
                     out_ref):          # (B, C)   f32 blended scores
    f32, bf16 = jnp.float32, jnp.bfloat16
    H, F2 = HID, 2 * FC_HID

    # ---- all embedding gathers as ONE one-hot bf16 matmul -------------------
    idx = idx_ref[...]                                               # (168, 1)
    col = lax.broadcasted_iota(jnp.int32, (TOT_ROWS, VOCAB), 1)      # (168, 148)
    onehot = jnp.where(idx == col, 1.0, 0.0).astype(bf16)
    emb = jnp.dot(onehot, emb_ref[...],
                  preferred_element_type=f32).astype(bf16)           # (168, 16)

    r0 = S * BP
    r1 = r0 + BP
    r2 = r1 + B * C
    trace_loc_e = emb[:r0, :]               # (64, 16) time-major, batch-padded
    des_e = emb[r0:r1, :]                   # (8, 16)
    cand_e = emb[r1:r2, :]                  # (32, 16)
    trace_time_e = emb[r2:, :TIME_EMB]      # (64, 8)

    # ---- small f32 vectors -----------------------------------------------------
    fb = fb_ref[...]                        # (5, 96)
    b_ih_eff = fb[0:1, :]                   # b_ih + [bhh_r | bhh_z | 0]
    b_hh_n = fb[1:2, :H]                    # (1, 32)
    w_dis = fb[2:3, :F2]                    # [wg1_dis | wh1_dis]
    b1 = fb[3:4, :F2]                       # [bg1 | bh1]
    w2 = fb[4:5, :F2]                       # [wg2 | wh2]

    # ---- GRU: input projection hoisted out of the recurrence ------------------
    gi_all = (jnp.dot(trace_loc_e, gruw_ref[0:LOC_EMB, :],
                      preferred_element_type=f32)
              + jnp.dot(trace_time_e, gruw_ref[LOC_EMB:LOC_EMB + TIME_EMB, :],
                        preferred_element_type=f32)
              + b_ih_eff)                                            # (64, 96)
    w_hh = gruw_ref[LOC_EMB + TIME_EMB:, :]                          # (32, 96) bf16
    lens = len_ref[...]                                              # (8, 1)

    h = jnp.zeros((BP, H), f32)
    for t in range(S):                       # fully unrolled recurrence (S = 8)
        gi = gi_all[t * BP:(t + 1) * BP]     # aligned (8, 96) tile slice
        gh = jnp.dot(h.astype(bf16), w_hh, preferred_element_type=f32)
        rz = jax.nn.sigmoid(gi[:, :2 * H] + gh[:, :2 * H])   # fused r|z sigmoid
        r = rz[:, :H]
        z = rz[:, H:]
        n = jnp.tanh(gi[:, 2 * H:] + r * (gh[:, 2 * H:] + b_hh_n))
        # trailing-padding mask (== pack_padded_sequence semantics)
        m_t = jnp.where(lens > float(t), 1.0, 0.0)
        h = h + m_t * (1.0 - z) * (n - h)

    # ---- both scoring heads fused (column-concatenated layer-1 weights) -------
    b_term = (jnp.dot(h.astype(bf16), headw_ref[0:HID, :],
                      preferred_element_type=f32)
              + jnp.dot(des_e, headw_ref[HID:HID + LOC_EMB, :],
                        preferred_element_type=f32)
              + b1)                                                  # (8, 64)
    c_term = jnp.dot(cand_e, headw_ref[HID + LOC_EMB:, :],
                     preferred_element_type=f32).reshape(B, C, F2)   # (2, 16, 64)

    dis3 = dis_ref[...][:, :, None]                                  # (B, C, 1)
    hid = jnp.maximum(c_term + b_term[:B][:, None, :] + dis3 * w_dis[None], 0.0)

    # ---- blend folded into layer-2 weights: one lane reduction ----------------
    w1 = scal_ref[0]
    lane = lax.broadcasted_iota(jnp.int32, (1, F2), 1)
    blend = jnp.where(lane < FC_HID, 1.0 - w1, w1)                   # (1, 64)
    w2_eff = w2 * blend
    bias2 = (1.0 - w1) * scal_ref[1] + w1 * scal_ref[2]
    out_ref[...] = jnp.sum(hid * w2_eff[None], axis=-1) + bias2


_VMEM = pl.BlockSpec(memory_space=pltpu.MemorySpace.VMEM)
_SMEM = pl.BlockSpec(memory_space=pltpu.MemorySpace.SMEM)

_generator_call = pl.pallas_call(
    generator_kernel,
    out_shape=jax.ShapeDtypeStruct((B, C), jnp.float32),
    in_specs=[_SMEM] + [_VMEM] * 7,
    out_specs=_VMEM,
)


# ------------------------------ wrapper -------------------------------------
@jax.jit
def generator_v4_forward(p, trace_loc, trace_time, des, candidate_set,
                         candidate_dis, trace_mask):
    # Only trivial int32 index packing stays outside the kernel; all f32
    # embedding gathers / concats happen in-kernel via the one-hot matmul.
    pad_b = BP - B
    loc_tm = jnp.pad(trace_loc.astype(jnp.int32).T, ((0, 0), (0, pad_b)))    # (S, BP)
    time_tm = jnp.pad(trace_time.astype(jnp.int32).T, ((0, 0), (0, pad_b)))  # (S, BP)
    des_p = jnp.pad(des.astype(jnp.int32), (0, pad_b))                       # (BP,)
    idx = jnp.concatenate([
        loc_tm.reshape(S * BP),
        des_p,
        candidate_set.astype(jnp.int32).reshape(B * C),
        time_tm.reshape(S * BP) + NUM_LOC,          # time rows offset into table
    ]).reshape(TOT_ROWS, 1)
    # trailing-padding lengths (pack_padded_sequence semantics)
    lens = jnp.pad(jnp.sum(trace_mask.astype(jnp.float32), axis=1),
                   (0, pad_b)).reshape(BP, 1)
    return _generator_call(p['scal'], idx, lens,
                           candidate_dis.astype(jnp.float32),
                           p['emb_tbl'], p['gru_w'], p['head_w'], p['fbias'])


# ------------------------------- parameters ----------------------------------
def init_params(key):
    ks = jax.random.split(key, 20)
    sc = 0.1
    f32 = jnp.float32
    loc_emb = sc * jax.random.normal(ks[0], (NUM_LOC, LOC_EMB), f32)
    time_emb = sc * jax.random.normal(ks[1], (NUM_TIME, TIME_EMB), f32)
    # GRU (gate order [r | z | n]), input weights row-split over [loc | time]
    w_ih_loc = sc * jax.random.normal(ks[2], (LOC_EMB, 3 * HID), f32)
    w_ih_time = sc * jax.random.normal(ks[3], (TIME_EMB, 3 * HID), f32)
    w_hh = sc * jax.random.normal(ks[4], (HID, 3 * HID), f32)
    b_ih = sc * jax.random.normal(ks[5], (1, 3 * HID), f32)
    b_hh = sc * jax.random.normal(ks[6], (1, 3 * HID), f32)
    # g-head (uses h, des, cand, dis); h-head (uses cand, des, dis)
    wg1_h = sc * jax.random.normal(ks[7], (HID, FC_HID), f32)
    wg1_des = sc * jax.random.normal(ks[8], (LOC_EMB, FC_HID), f32)
    wg1_cand = sc * jax.random.normal(ks[9], (LOC_EMB, FC_HID), f32)
    wg1_dis = sc * jax.random.normal(ks[10], (1, FC_HID), f32)
    bg1 = sc * jax.random.normal(ks[11], (1, FC_HID), f32)
    wg2 = sc * jax.random.normal(ks[12], (1, FC_HID), f32)
    bg2 = sc * jax.random.normal(ks[13], (), f32)
    wh1_cand = sc * jax.random.normal(ks[14], (LOC_EMB, FC_HID), f32)
    wh1_des = sc * jax.random.normal(ks[15], (LOC_EMB, FC_HID), f32)
    wh1_dis = sc * jax.random.normal(ks[16], (1, FC_HID), f32)
    bh1 = sc * jax.random.normal(ks[17], (1, FC_HID), f32)
    wh2 = sc * jax.random.normal(ks[18], (1, FC_HID), f32)
    bh2 = sc * jax.random.normal(ks[19], (), f32)

    # ----------------- pack into kernel slabs (done once, offline) -----------------
    bf16 = jnp.bfloat16
    emb_tbl = jnp.concatenate(
        [loc_emb, jnp.pad(time_emb, ((0, 0), (0, LOC_EMB - TIME_EMB)))],
        axis=0).astype(bf16)                                          # (148, 16)
    gru_w = jnp.concatenate([w_ih_loc, w_ih_time, w_hh], axis=0).astype(bf16)  # (56, 96)
    head_w = jnp.concatenate([
        jnp.concatenate([wg1_h, jnp.zeros((HID, FC_HID), f32)], axis=1),  # h-head ignores h
        jnp.concatenate([wg1_des, wh1_des], axis=1),
        jnp.concatenate([wg1_cand, wh1_cand], axis=1),
    ], axis=0).astype(bf16)                                           # (64, 64)

    def _row96(v):
        v = v.reshape(1, -1)
        return jnp.pad(v, ((0, 0), (0, 3 * HID - v.shape[1])))
    # fold the r/z slices of b_hh into b_ih; the n-gate bias must stay separate
    b_ih_eff = b_ih + jnp.concatenate(
        [b_hh[:, :HID], b_hh[:, HID:2 * HID], jnp.zeros((1, HID), f32)], axis=1)
    fbias = jnp.concatenate([
        _row96(b_ih_eff),
        _row96(b_hh[:, 2 * HID:]),
        _row96(jnp.concatenate([wg1_dis, wh1_dis], axis=1)),
        _row96(jnp.concatenate([bg1, bh1], axis=1)),
        _row96(jnp.concatenate([wg2, wh2], axis=1)),
    ], axis=0)                                                        # (5, 96) f32
    # SMEM scalars: [w1 (= nn.Parameter(dis_weight)), bg2, bh2]
    scal = jnp.stack([jnp.asarray(DIS_WEIGHT, f32), bg2, bh2])
    return {'emb_tbl': emb_tbl, 'gru_w': gru_w, 'head_w': head_w,
            'fbias': fbias, 'scal': scal}


# --------------------------------- main ---------------------------------------
if __name__ == "__main__":
    key = jax.random.PRNGKey(0)
    pk, ik = jax.random.split(key)
    params = init_params(pk)

    iks = jax.random.split(ik, 6)
    trace_loc = jax.random.randint(iks[0], (B, S), 0, NUM_LOC, dtype=jnp.int32)
    trace_time = jax.random.randint(iks[1], (B, S), 0, NUM_TIME, dtype=jnp.int32)
    des = jax.random.randint(iks[2], (B,), 0, NUM_LOC, dtype=jnp.int32)
    candidate_set = jax.random.randint(iks[3], (B, C), 0, NUM_LOC, dtype=jnp.int32)
    candidate_dis = jax.random.uniform(iks[4], (B, C), jnp.float32)
    lengths = jnp.array([S, 5], dtype=jnp.int32)
    trace_mask = (jnp.arange(S)[None, :] < lengths[:, None]).astype(jnp.float32)

    out = generator_v4_forward(params, trace_loc, trace_time, des,
                               candidate_set, candidate_dis, trace_mask)
    out = jax.block_until_ready(out)

    assert out.shape == (B, C)
    assert bool(jnp.all(jnp.isfinite(out)))
    print("KERNEL_OK")
</pallas_src>

<mosaic_0001>
module attributes {stable_mosaic.version = 11 : i64} {
  func.func @generator_kernel(%arg0: memref<3xf32, #tpu.memory_space<smem>>, %arg1: memref<168x1xi32, #tpu.memory_space<vmem>>, %arg2: memref<8x1xf32, #tpu.memory_space<vmem>>, %arg3: memref<2x16xf32, #tpu.memory_space<vmem>>, %arg4: memref<148x16xbf16, #tpu.memory_space<vmem>>, %arg5: memref<56x96xbf16, #tpu.memory_space<vmem>>, %arg6: memref<64x64xbf16, #tpu.memory_space<vmem>>, %arg7: memref<5x96xf32, #tpu.memory_space<vmem>>, %arg8: memref<2x16xf32, #tpu.memory_space<vmem>>) attributes {dimension_semantics = [], scalar_prefetch = 0 : i64, scratch_operands = 0 : i64, tpu.core_type = #tpu.core_type<tc>} {
    %c0 = arith.constant 0 : index
    %c0_0 = arith.constant 0 : index
    %0 = vector.load %arg1[%c0, %c0_0] : memref<168x1xi32, #tpu.memory_space<vmem>>, vector<168x1xi32>
    %1 = tpu.iota {dimensions = array<i32: 1>} : vector<168x148xi32>
    %2 = vector.broadcast %0 : vector<168x1xi32> to vector<168x148xi32>
    %3 = arith.cmpi eq, %2, %1 : vector<168x148xi32>
    %cst = arith.constant 1.000000e+00 : f32
    %cst_1 = arith.constant 0.000000e+00 : f32
    %4 = vector.broadcast %cst : f32 to vector<168x148xf32>
    %5 = vector.broadcast %cst_1 : f32 to vector<168x148xf32>
    %6 = arith.select %3, %4, %5 : vector<168x148xi1>, vector<168x148xf32>
    %7 = arith.truncf %6 : vector<168x148xf32> to vector<168x148xbf16>
    %c0_2 = arith.constant 0 : index
    %c0_3 = arith.constant 0 : index
    %8 = vector.load %arg4[%c0_2, %c0_3] : memref<148x16xbf16, #tpu.memory_space<vmem>>, vector<148x16xbf16>
    %cst_4 = arith.constant dense<0.000000e+00> : vector<168x16xf32>
    %9 = tpu.matmul %7, %8, %cst_4 {dimension_numbers = #tpu.dot_dimension_numbers<[1], [0], [0], [1], [0, 0, 1, 1], [], []>} : vector<168x148xbf16>, vector<148x16xbf16>, vector<168x16xf32> -> vector<168x16xf32>
    %10 = arith.truncf %9 : vector<168x16xf32> to vector<168x16xbf16>
    %11 = vector.extract_strided_slice %10 {offsets = [0, 0], sizes = [64, 16], strides = [1, 1]} : vector<168x16xbf16> to vector<64x16xbf16>
    %12 = vector.extract_strided_slice %10 {offsets = [64, 0], sizes = [8, 16], strides = [1, 1]} : vector<168x16xbf16> to vector<8x16xbf16>
    %13 = vector.extract_strided_slice %10 {offsets = [72, 0], sizes = [32, 16], strides = [1, 1]} : vector<168x16xbf16> to vector<32x16xbf16>
    %14 = vector.extract_strided_slice %10 {offsets = [104, 0], sizes = [64, 8], strides = [1, 1]} : vector<168x16xbf16> to vector<64x8xbf16>
    %c0_5 = arith.constant 0 : index
    %c0_6 = arith.constant 0 : index
    %15 = vector.load %arg7[%c0_5, %c0_6] : memref<5x96xf32, #tpu.memory_space<vmem>>, vector<5x96xf32>
    %16 = vector.extract_strided_slice %15 {offsets = [0, 0], sizes = [1, 96], strides = [1, 1]} : vector<5x96xf32> to vector<1x96xf32>
    %17 = vector.extract_strided_slice %15 {offsets = [1, 0], sizes = [1, 32], strides = [1, 1]} : vector<5x96xf32> to vector<1x32xf32>
    %18 = vector.extract_strided_slice %15 {offsets = [2, 0], sizes = [1, 64], strides = [1, 1]} : vector<5x96xf32> to vector<1x64xf32>
    %19 = vector.extract_strided_slice %15 {offsets = [3, 0], sizes = [1, 64], strides = [1, 1]} : vector<5x96xf32> to vector<1x64xf32>
    %20 = vector.extract_strided_slice %15 {offsets = [4, 0], sizes = [1, 64], strides = [1, 1]} : vector<5x96xf32> to vector<1x64xf32>
    %c0_7 = arith.constant 0 : index
    %c0_8 = arith.constant 0 : index
    %21 = vector.load %arg5[%c0_7, %c0_8] : memref<56x96xbf16, #tpu.memory_space<vmem>>, vector<16x96xbf16>
    %cst_9 = arith.constant dense<0.000000e+00> : vector<64x96xf32>
    %22 = tpu.matmul %11, %21, %cst_9 {dimension_numbers = #tpu.dot_dimension_numbers<[1], [0], [0], [1], [0, 0, 1, 1], [], []>} : vector<64x16xbf16>, vector<16x96xbf16>, vector<64x96xf32> -> vector<64x96xf32>
    %c16 = arith.constant 16 : index
    %c0_10 = arith.constant 0 : index
    %23 = vector.load %arg5[%c16, %c0_10] : memref<56x96xbf16, #tpu.memory_space<vmem>>, vector<8x96xbf16>
    %cst_11 = arith.constant dense<0.000000e+00> : vector<64x96xf32>
    %24 = tpu.matmul %14, %23, %cst_11 {dimension_numbers = #tpu.dot_dimension_numbers<[1], [0], [0], [1], [0, 0, 1, 1], [], []>} : vector<64x8xbf16>, vector<8x96xbf16>, vector<64x96xf32> -> vector<64x96xf32>
    %25 = arith.addf %22, %24 : vector<64x96xf32>
    %26 = vector.broadcast %16 : vector<1x96xf32> to vector<64x96xf32>
    %27 = arith.addf %25, %26 : vector<64x96xf32>
    %c24 = arith.constant 24 : index
    %c0_12 = arith.constant 0 : index
    %28 = vector.load %arg5[%c24, %c0_12] : memref<56x96xbf16, #tpu.memory_space<vmem>>, vector<32x96xbf16>
    %c0_13 = arith.constant 0 : index
    %c0_14 = arith.constant 0 : index
    %29 = vector.load %arg2[%c0_13, %c0_14] : memref<8x1xf32, #tpu.memory_space<vmem>>, vector<8x1xf32>
    %cst_15 = arith.constant 0.000000e+00 : f32
    %30 = vector.broadcast %cst_15 : f32 to vector<8x32xf32>
    %31 = vector.extract_strided_slice %27 {offsets = [0, 0], sizes = [8, 96], strides = [1, 1]} : vector<64x96xf32> to vector<8x96xf32>
    %32 = arith.truncf %30 : vector<8x32xf32> to vector<8x32xbf16>
    %cst_16 = arith.constant dense<0.000000e+00> : vector<8x96xf32>
    %33 = tpu.matmul %32, %28, %cst_16 {dimension_numbers = #tpu.dot_dimension_numbers<[1], [0], [0], [1], [0, 0, 1, 1], [], []>} : vector<8x32xbf16>, vector<32x96xbf16>, vector<8x96xf32> -> vector<8x96xf32>
    %34 = vector.extract_strided_slice %31 {offsets = [0, 0], sizes = [8, 64], strides = [1, 1]} : vector<8x96xf32> to vector<8x64xf32>
    %35 = vector.extract_strided_slice %33 {offsets = [0, 0], sizes = [8, 64], strides = [1, 1]} : vector<8x96xf32> to vector<8x64xf32>
    %36 = arith.addf %34, %35 : vector<8x64xf32>
    %37 = arith.negf %36 : vector<8x64xf32>
    %38 = math.exp %37 : vector<8x64xf32>
    %cst_17 = arith.constant 1.000000e+00 : f32
    %39 = vector.broadcast %cst_17 : f32 to vector<8x64xf32>
    %40 = arith.addf %39, %38 : vector<8x64xf32>
    %41 = arith.divf %39, %40 : vector<8x64xf32>
    %42 = vector.extract_strided_slice %41 {offsets = [0, 0], sizes = [8, 32], strides = [1, 1]} : vector<8x64xf32> to vector<8x32xf32>
    %43 = vector.extract_strided_slice %41 {offsets = [0, 32], sizes = [8, 32], strides = [1, 1]} : vector<8x64xf32> to vector<8x32xf32>
    %44 = vector.extract_strided_slice %31 {offsets = [0, 64], sizes = [8, 32], strides = [1, 1]} : vector<8x96xf32> to vector<8x32xf32>
    %45 = vector.extract_strided_slice %33 {offsets = [0, 64], sizes = [8, 32], strides = [1, 1]} : vector<8x96xf32> to vector<8x32xf32>
    %46 = vector.broadcast %17 : vector<1x32xf32> to vector<8x32xf32>
    %47 = arith.addf %45, %46 : vector<8x32xf32>
    %48 = arith.mulf %42, %47 : vector<8x32xf32>
    %49 = arith.addf %44, %48 : vector<8x32xf32>
    %50 = math.tanh %49 : vector<8x32xf32>
    %cst_18 = arith.constant 0.000000e+00 : f32
    %51 = vector.broadcast %cst_18 : f32 to vector<8x1xf32>
    %52 = arith.cmpf ogt, %29, %51 : vector<8x1xf32>
    %cst_19 = arith.constant 1.000000e+00 : f32
    %cst_20 = arith.constant 0.000000e+00 : f32
    %53 = vector.broadcast %cst_19 : f32 to vector<8x1xf32>
    %54 = vector.broadcast %cst_20 : f32 to vector<8x1xf32>
    %55 = arith.select %52, %53, %54 : vector<8x1xi1>, vector<8x1xf32>
    %cst_21 = arith.constant 1.000000e+00 : f32
    %56 = vector.broadcast %cst_21 : f32 to vector<8x32xf32>
    %57 = arith.subf %56, %43 : vector<8x32xf32>
    %58 = vector.broadcast %55 : vector<8x1xf32> to vector<8x32xf32>
    %59 = arith.mulf %58, %57 : vector<8x32xf32>
    %60 = arith.subf %50, %30 : vector<8x32xf32>
    %61 = arith.mulf %59, %60 : vector<8x32xf32>
    %62 = arith.addf %30, %61 : vector<8x32xf32>
    %63 = vector.extract_strided_slice %27 {offsets = [8, 0], sizes = [8, 96], strides = [1, 1]} : vector<64x96xf32> to vector<8x96xf32>
    %64 = arith.truncf %62 : vector<8x32xf32> to vector<8x32xbf16>
    %cst_22 = arith.constant dense<0.000000e+00> : vector<8x96xf32>
    %65 = tpu.matmul %64, %28, %cst_22 {dimension_numbers = #tpu.dot_dimension_numbers<[1], [0], [0], [1], [0, 0, 1, 1], [], []>} : vector<8x32xbf16>, vector<32x96xbf16>, vector<8x96xf32> -> vector<8x96xf32>
    %66 = vector.extract_strided_slice %63 {offsets = [0, 0], sizes = [8, 64], strides = [1, 1]} : vector<8x96xf32> to vector<8x64xf32>
    %67 = vector.extract_strided_slice %65 {offsets = [0, 0], sizes = [8, 64], strides = [1, 1]} : vector<8x96xf32> to vector<8x64xf32>
    %68 = arith.addf %66, %67 : vector<8x64xf32>
    %69 = arith.negf %68 : vector<8x64xf32>
    %70 = math.exp %69 : vector<8x64xf32>
    %cst_23 = arith.constant 1.000000e+00 : f32
    %71 = vector.broadcast %cst_23 : f32 to vector<8x64xf32>
    %72 = arith.addf %71, %70 : vector<8x64xf32>
    %73 = arith.divf %71, %72 : vector<8x64xf32>
    %74 = vector.extract_strided_slice %73 {offsets = [0, 0], sizes = [8, 32], strides = [1, 1]} : vector<8x64xf32> to vector<8x32xf32>
    %75 = vector.extract_strided_slice %73 {offsets = [0, 32], sizes = [8, 32], strides = [1, 1]} : vector<8x64xf32> to vector<8x32xf32>
    %76 = vector.extract_strided_slice %63 {offsets = [0, 64], sizes = [8, 32], strides = [1, 1]} : vector<8x96xf32> to vector<8x32xf32>
    %77 = vector.extract_strided_slice %65 {offsets = [0, 64], sizes = [8, 32], strides = [1, 1]} : vector<8x96xf32> to vector<8x32xf32>
    %78 = vector.broadcast %17 : vector<1x32xf32> to vector<8x32xf32>
    %79 = arith.addf %77, %78 : vector<8x32xf32>
    %80 = arith.mulf %74, %79 : vector<8x32xf32>
    %81 = arith.addf %76, %80 : vector<8x32xf32>
    %82 = math.tanh %81 : vector<8x32xf32>
    %cst_24 = arith.constant 1.000000e+00 : f32
    %83 = vector.broadcast %cst_24 : f32 to vector<8x1xf32>
    %84 = arith.cmpf ogt, %29, %83 : vector<8x1xf32>
    %cst_25 = arith.constant 1.000000e+00 : f32
    %cst_26 = arith.constant 0.000000e+00 : f32
    %85 = vector.broadcast %cst_25 : f32 to vector<8x1xf32>
    %86 = vector.broadcast %cst_26 : f32 to vector<8x1xf32>
    %87 = arith.select %84, %85, %86 : vector<8x1xi1>, vector<8x1xf32>
    %cst_27 = arith.constant 1.000000e+00 : f32
    %88 = vector.broadcast %cst_27 : f32 to vector<8x32xf32>
    %89 = arith.subf %88, %75 : vector<8x32xf32>
    %90 = vector.broadcast %87 : vector<8x1xf32> to vector<8x32xf32>
    %91 = arith.mulf %90, %89 : vector<8x32xf32>
    %92 = arith.subf %82, %62 : vector<8x32xf32>
    %93 = arith.mulf %91, %92 : vector<8x32xf32>
    %94 = arith.addf %62, %93 : vector<8x32xf32>
    %95 = vector.extract_strided_slice %27 {offsets = [16, 0], sizes = [8, 96], strides = [1, 1]} : vector<64x96xf32> to vector<8x96xf32>
    %96 = arith.truncf %94 : vector<8x32xf32> to vector<8x32xbf16>
    %cst_28 = arith.constant dense<0.000000e+00> : vector<8x96xf32>
    %97 = tpu.matmul %96, %28, %cst_28 {dimension_numbers = #tpu.dot_dimension_numbers<[1], [0], [0], [1], [0, 0, 1, 1], [], []>} : vector<8x32xbf16>, vector<32x96xbf16>, vector<8x96xf32> -> vector<8x96xf32>
    %98 = vector.extract_strided_slice %95 {offsets = [0, 0], sizes = [8, 64], strides = [1, 1]} : vector<8x96xf32> to vector<8x64xf32>
    %99 = vector.extract_strided_slice %97 {offsets = [0, 0], sizes = [8, 64], strides = [1, 1]} : vector<8x96xf32> to vector<8x64xf32>
    %100 = arith.addf %98, %99 : vector<8x64xf32>
    %101 = arith.negf %100 : vector<8x64xf32>
    %102 = math.exp %101 : vector<8x64xf32>
    %cst_29 = arith.constant 1.000000e+00 : f32
    %103 = vector.broadcast %cst_29 : f32 to vector<8x64xf32>
    %104 = arith.addf %103, %102 : vector<8x64xf32>
    %105 = arith.divf %103, %104 : vector<8x64xf32>
    %106 = vector.extract_strided_slice %105 {offsets = [0, 0], sizes = [8, 32], strides = [1, 1]} : vector<8x64xf32> to vector<8x32xf32>
    %107 = vector.extract_strided_slice %105 {offsets = [0, 32], sizes = [8, 32], strides = [1, 1]} : vector<8x64xf32> to vector<8x32xf32>
    %108 = vector.extract_strided_slice %95 {offsets = [0, 64], sizes = [8, 32], strides = [1, 1]} : vector<8x96xf32> to vector<8x32xf32>
    %109 = vector.extract_strided_slice %97 {offsets = [0, 64], sizes = [8, 32], strides = [1, 1]} : vector<8x96xf32> to vector<8x32xf32>
    %110 = vector.broadcast %17 : vector<1x32xf32> to vector<8x32xf32>
    %111 = arith.addf %109, %110 : vector<8x32xf32>
    %112 = arith.mulf %106, %111 : vector<8x32xf32>
    %113 = arith.addf %108, %112 : vector<8x32xf32>
    %114 = math.tanh %113 : vector<8x32xf32>
    %cst_30 = arith.constant 2.000000e+00 : f32
    %115 = vector.broadcast %cst_30 : f32 to vector<8x1xf32>
    %116 = arith.cmpf ogt, %29, %115 : vector<8x1xf32>
    %cst_31 = arith.constant 1.000000e+00 : f32
    %cst_32 = arith.constant 0.000000e+00 : f32
    %117 = vector.broadcast %cst_31 : f32 to vector<8x1xf32>
    %118 = vector.broadcast %cst_32 : f32 to vector<8x1xf32>
    %119 = arith.select %116, %117, %118 : vector<8x1xi1>, vector<8x1xf32>
    %cst_33 = arith.constant 1.000000e+00 : f32
    %120 = vector.broadcast %cst_33 : f32 to vector<8x32xf32>
    %121 = arith.subf %120, %107 : vector<8x32xf32>
    %122 = vector.broadcast %119 : vector<8x1xf32> to vector<8x32xf32>
    %123 = arith.mulf %122, %121 : vector<8x32xf32>
    %124 = arith.subf %114, %94 : vector<8x32xf32>
    %125 = arith.mulf %123, %124 : vector<8x32xf32>
    %126 = arith.addf %94, %125 : vector<8x32xf32>
    %127 = vector.extract_strided_slice %27 {offsets = [24, 0], sizes = [8, 96], strides = [1, 1]} : vector<64x96xf32> to vector<8x96xf32>
    %128 = arith.truncf %126 : vector<8x32xf32> to vector<8x32xbf16>
    %cst_34 = arith.constant dense<0.000000e+00> : vector<8x96xf32>
    %129 = tpu.matmul %128, %28, %cst_34 {dimension_numbers = #tpu.dot_dimension_numbers<[1], [0], [0], [1], [0, 0, 1, 1], [], []>} : vector<8x32xbf16>, vector<32x96xbf16>, vector<8x96xf32> -> vector<8x96xf32>
    %130 = vector.extract_strided_slice %127 {offsets = [0, 0], sizes = [8, 64], strides = [1, 1]} : vector<8x96xf32> to vector<8x64xf32>
    %131 = vector.extract_strided_slice %129 {offsets = [0, 0], sizes = [8, 64], strides = [1, 1]} : vector<8x96xf32> to vector<8x64xf32>
    %132 = arith.addf %130, %131 : vector<8x64xf32>
    %133 = arith.negf %132 : vector<8x64xf32>
    %134 = math.exp %133 : vector<8x64xf32>
    %cst_35 = arith.constant 1.000000e+00 : f32
    %135 = vector.broadcast %cst_35 : f32 to vector<8x64xf32>
    %136 = arith.addf %135, %134 : vector<8x64xf32>
    %137 = arith.divf %135, %136 : vector<8x64xf32>
    %138 = vector.extract_strided_slice %137 {offsets = [0, 0], sizes = [8, 32], strides = [1, 1]} : vector<8x64xf32> to vector<8x32xf32>
    %139 = vector.extract_strided_slice %137 {offsets = [0, 32], sizes = [8, 32], strides = [1, 1]} : vector<8x64xf32> to vector<8x32xf32>
    %140 = vector.extract_strided_slice %127 {offsets = [0, 64], sizes = [8, 32], strides = [1, 1]} : vector<8x96xf32> to vector<8x32xf32>
    %141 = vector.extract_strided_slice %129 {offsets = [0, 64], sizes = [8, 32], strides = [1, 1]} : vector<8x96xf32> to vector<8x32xf32>
    %142 = vector.broadcast %17 : vector<1x32xf32> to vector<8x32xf32>
    %143 = arith.addf %141, %142 : vector<8x32xf32>
    %144 = arith.mulf %138, %143 : vector<8x32xf32>
    %145 = arith.addf %140, %144 : vector<8x32xf32>
    %146 = math.tanh %145 : vector<8x32xf32>
    %cst_36 = arith.constant 3.000000e+00 : f32
    %147 = vector.broadcast %cst_36 : f32 to vector<8x1xf32>
    %148 = arith.cmpf ogt, %29, %147 : vector<8x1xf32>
    %cst_37 = arith.constant 1.000000e+00 : f32
    %cst_38 = arith.constant 0.000000e+00 : f32
    %149 = vector.broadcast %cst_37 : f32 to vector<8x1xf32>
    %150 = vector.broadcast %cst_38 : f32 to vector<8x1xf32>
    %151 = arith.select %148, %149, %150 : vector<8x1xi1>, vector<8x1xf32>
    %cst_39 = arith.constant 1.000000e+00 : f32
    %152 = vector.broadcast %cst_39 : f32 to vector<8x32xf32>
    %153 = arith.subf %152, %139 : vector<8x32xf32>
    %154 = vector.broadcast %151 : vector<8x1xf32> to vector<8x32xf32>
    %155 = arith.mulf %154, %153 : vector<8x32xf32>
    %156 = arith.subf %146, %126 : vector<8x32xf32>
    %157 = arith.mulf %155, %156 : vector<8x32xf32>
    %158 = arith.addf %126, %157 : vector<8x32xf32>
    %159 = vector.extract_strided_slice %27 {offsets = [32, 0], sizes = [8, 96], strides = [1, 1]} : vector<64x96xf32> to vector<8x96xf32>
    %160 = arith.truncf %158 : vector<8x32xf32> to vector<8x32xbf16>
    %cst_40 = arith.constant dense<0.000000e+00> : vector<8x96xf32>
    %161 = tpu.matmul %160, %28, %cst_40 {dimension_numbers = #tpu.dot_dimension_numbers<[1], [0], [0], [1], [0, 0, 1, 1], [], []>} : vector<8x32xbf16>, vector<32x96xbf16>, vector<8x96xf32> -> vector<8x96xf32>
    %162 = vector.extract_strided_slice %159 {offsets = [0, 0], sizes = [8, 64], strides = [1, 1]} : vector<8x96xf32> to vector<8x64xf32>
    %163 = vector.extract_strided_slice %161 {offsets = [0, 0], sizes = [8, 64], strides = [1, 1]} : vector<8x96xf32> to vector<8x64xf32>
    %164 = arith.addf %162, %163 : vector<8x64xf32>
    %165 = arith.negf %164 : vector<8x64xf32>
    %166 = math.exp %165 : vector<8x64xf32>
    %cst_41 = arith.constant 1.000000e+00 : f32
    %167 = vector.broadcast %cst_41 : f32 to vector<8x64xf32>
    %168 = arith.addf %167, %166 : vector<8x64xf32>
    %169 = arith.divf %167, %168 : vector<8x64xf32>
    %170 = vector.extract_strided_slice %169 {offsets = [0, 0], sizes = [8, 32], strides = [1, 1]} : vector<8x64xf32> to vector<8x32xf32>
    %171 = vector.extract_strided_slice %169 {offsets = [0, 32], sizes = [8, 32], strides = [1, 1]} : vector<8x64xf32> to vector<8x32xf32>
    %172 = vector.extract_strided_slice %159 {offsets = [0, 64], sizes = [8, 32], strides = [1, 1]} : vector<8x96xf32> to vector<8x32xf32>
    %173 = vector.extract_strided_slice %161 {offsets = [0, 64], sizes = [8, 32], strides = [1, 1]} : vector<8x96xf32> to vector<8x32xf32>
    %174 = vector.broadcast %17 : vector<1x32xf32> to vector<8x32xf32>
    %175 = arith.addf %173, %174 : vector<8x32xf32>
    %176 = arith.mulf %170, %175 : vector<8x32xf32>
    %177 = arith.addf %172, %176 : vector<8x32xf32>
    %178 = math.tanh %177 : vector<8x32xf32>
    %cst_42 = arith.constant 4.000000e+00 : f32
    %179 = vector.broadcast %cst_42 : f32 to vector<8x1xf32>
    %180 = arith.cmpf ogt, %29, %179 : vector<8x1xf32>
    %cst_43 = arith.constant 1.000000e+00 : f32
    %cst_44 = arith.constant 0.000000e+00 : f32
    %181 = vector.broadcast %cst_43 : f32 to vector<8x1xf32>
    %182 = vector.broadcast %cst_44 : f32 to vector<8x1xf32>
    %183 = arith.select %180, %181, %182 : vector<8x1xi1>, vector<8x1xf32>
    %cst_45 = arith.constant 1.000000e+00 : f32
    %184 = vector.broadcast %cst_45 : f32 to vector<8x32xf32>
    %185 = arith.subf %184, %171 : vector<8x32xf32>
    %186 = vector.broadcast %183 : vector<8x1xf32> to vector<8x32xf32>
    %187 = arith.mulf %186, %185 : vector<8x32xf32>
    %188 = arith.subf %178, %158 : vector<8x32xf32>
    %189 = arith.mulf %187, %188 : vector<8x32xf32>
    %190 = arith.addf %158, %189 : vector<8x32xf32>
    %191 = vector.extract_strided_slice %27 {offsets = [40, 0], sizes = [8, 96], strides = [1, 1]} : vector<64x96xf32> to vector<8x96xf32>
    %192 = arith.truncf %190 : vector<8x32xf32> to vector<8x32xbf16>
    %cst_46 = arith.constant dense<0.000000e+00> : vector<8x96xf32>
    %193 = tpu.matmul %192, %28, %cst_46 {dimension_numbers = #tpu.dot_dimension_numbers<[1], [0], [0], [1], [0, 0, 1, 1], [], []>} : vector<8x32xbf16>, vector<32x96xbf16>, vector<8x96xf32> -> vector<8x96xf32>
    %194 = vector.extract_strided_slice %191 {offsets = [0, 0], sizes = [8, 64], strides = [1, 1]} : vector<8x96xf32> to vector<8x64xf32>
    %195 = vector.extract_strided_slice %193 {offsets = [0, 0], sizes = [8, 64], strides = [1, 1]} : vector<8x96xf32> to vector<8x64xf32>
    %196 = arith.addf %194, %195 : vector<8x64xf32>
    %197 = arith.negf %196 : vector<8x64xf32>
    %198 = math.exp %197 : vector<8x64xf32>
    %cst_47 = arith.constant 1.000000e+00 : f32
    %199 = vector.broadcast %cst_47 : f32 to vector<8x64xf32>
    %200 = arith.addf %199, %198 : vector<8x64xf32>
    %201 = arith.divf %199, %200 : vector<8x64xf32>
    %202 = vector.extract_strided_slice %201 {offsets = [0, 0], sizes = [8, 32], strides = [1, 1]} : vector<8x64xf32> to vector<8x32xf32>
    %203 = vector.extract_strided_slice %201 {offsets = [0, 32], sizes = [8, 32], strides = [1, 1]} : vector<8x64xf32> to vector<8x32xf32>
    %204 = vector.extract_strided_slice %191 {offsets = [0, 64], sizes = [8, 32], strides = [1, 1]} : vector<8x96xf32> to vector<8x32xf32>
    %205 = vector.extract_strided_slice %193 {offsets = [0, 64], sizes = [8, 32], strides = [1, 1]} : vector<8x96xf32> to vector<8x32xf32>
    %206 = vector.broadcast %17 : vector<1x32xf32> to vector<8x32xf32>
    %207 = arith.addf %205, %206 : vector<8x32xf32>
    %208 = arith.mulf %202, %207 : vector<8x32xf32>
    %209 = arith.addf %204, %208 : vector<8x32xf32>
    %210 = math.tanh %209 : vector<8x32xf32>
    %cst_48 = arith.constant 5.000000e+00 : f32
    %211 = vector.broadcast %cst_48 : f32 to vector<8x1xf32>
    %212 = arith.cmpf ogt, %29, %211 : vector<8x1xf32>
    %cst_49 = arith.constant 1.000000e+00 : f32
    %cst_50 = arith.constant 0.000000e+00 : f32
    %213 = vector.broadcast %cst_49 : f32 to vector<8x1xf32>
    %214 = vector.broadcast %cst_50 : f32 to vector<8x1xf32>
    %215 = arith.select %212, %213, %214 : vector<8x1xi1>, vector<8x1xf32>
    %cst_51 = arith.constant 1.000000e+00 : f32
    %216 = vector.broadcast %cst_51 : f32 to vector<8x32xf32>
    %217 = arith.subf %216, %203 : vector<8x32xf32>
    %218 = vector.broadcast %215 : vector<8x1xf32> to vector<8x32xf32>
    %219 = arith.mulf %218, %217 : vector<8x32xf32>
    %220 = arith.subf %210, %190 : vector<8x32xf32>
    %221 = arith.mulf %219, %220 : vector<8x32xf32>
    %222 = arith.addf %190, %221 : vector<8x32xf32>
    %223 = vector.extract_strided_slice %27 {offsets = [48, 0], sizes = [8, 96], strides = [1, 1]} : vector<64x96xf32> to vector<8x96xf32>
    %224 = arith.truncf %222 : vector<8x32xf32> to vector<8x32xbf16>
    %cst_52 = arith.constant dense<0.000000e+00> : vector<8x96xf32>
    %225 = tpu.matmul %224, %28, %cst_52 {dimension_numbers = #tpu.dot_dimension_numbers<[1], [0], [0], [1], [0, 0, 1, 1], [], []>} : vector<8x32xbf16>, vector<32x96xbf16>, vector<8x96xf32> -> vector<8x96xf32>
    %226 = vector.extract_strided_slice %223 {offsets = [0, 0], sizes = [8, 64], strides = [1, 1]} : vector<8x96xf32> to vector<8x64xf32>
    %227 = vector.extract_strided_slice %225 {offsets = [0, 0], sizes = [8, 64], strides = [1, 1]} : vector<8x96xf32> to vector<8x64xf32>
    %228 = arith.addf %226, %227 : vector<8x64xf32>
    %229 = arith.negf %228 : vector<8x64xf32>
    %230 = math.exp %229 : vector<8x64xf32>
    %cst_53 = arith.constant 1.000000e+00 : f32
    %231 = vector.broadcast %cst_53 : f32 to vector<8x64xf32>
    %232 = arith.addf %231, %230 : vector<8x64xf32>
    %233 = arith.divf %231, %232 : vector<8x64xf32>
    %234 = vector.extract_strided_slice %233 {offsets = [0, 0], sizes = [8, 32], strides = [1, 1]} : vector<8x64xf32> to vector<8x32xf32>
    %235 = vector.extract_strided_slice %233 {offsets = [0, 32], sizes = [8, 32], strides = [1, 1]} : vector<8x64xf32> to vector<8x32xf32>
    %236 = vector.extract_strided_slice %223 {offsets = [0, 64], sizes = [8, 32], strides = [1, 1]} : vector<8x96xf32> to vector<8x32xf32>
    %237 = vector.extract_strided_slice %225 {offsets = [0, 64], sizes = [8, 32], strides = [1, 1]} : vector<8x96xf32> to vector<8x32xf32>
    %238 = vector.broadcast %17 : vector<1x32xf32> to vector<8x32xf32>
    %239 = arith.addf %237, %238 : vector<8x32xf32>
    %240 = arith.mulf %234, %239 : vector<8x32xf32>
    %241 = arith.addf %236, %240 : vector<8x32xf32>
    %242 = math.tanh %241 : vector<8x32xf32>
    %cst_54 = arith.constant 6.000000e+00 : f32
    %243 = vector.broadcast %cst_54 : f32 to vector<8x1xf32>
    %244 = arith.cmpf ogt, %29, %243 : vector<8x1xf32>
    %cst_55 = arith.constant 1.000000e+00 : f32
    %cst_56 = arith.constant 0.000000e+00 : f32
    %245 = vector.broadcast %cst_55 : f32 to vector<8x1xf32>
    %246 = vector.broadcast %cst_56 : f32 to vector<8x1xf32>
    %247 = arith.select %244, %245, %246 : vector<8x1xi1>, vector<8x1xf32>
    %cst_57 = arith.constant 1.000000e+00 : f32
    %248 = vector.broadcast %cst_57 : f32 to vector<8x32xf32>
    %249 = arith.subf %248, %235 : vector<8x32xf32>
    %250 = vector.broadcast %247 : vector<8x1xf32> to vector<8x32xf32>
    %251 = arith.mulf %250, %249 : vector<8x32xf32>
    %252 = arith.subf %242, %222 : vector<8x32xf32>
    %253 = arith.mulf %251, %252 : vector<8x32xf32>
    %254 = arith.addf %222, %253 : vector<8x32xf32>
    %255 = vector.extract_strided_slice %27 {offsets = [56, 0], sizes = [8, 96], strides = [1, 1]} : vector<64x96xf32> to vector<8x96xf32>
    %256 = arith.truncf %254 : vector<8x32xf32> to vector<8x32xbf16>
    %cst_58 = arith.constant dense<0.000000e+00> : vector<8x96xf32>
    %257 = tpu.matmul %256, %28, %cst_58 {dimension_numbers = #tpu.dot_dimension_numbers<[1], [0], [0], [1], [0, 0, 1, 1], [], []>} : vector<8x32xbf16>, vector<32x96xbf16>, vector<8x96xf32> -> vector<8x96xf32>
    %258 = vector.extract_strided_slice %255 {offsets = [0, 0], sizes = [8, 64], strides = [1, 1]} : vector<8x96xf32> to vector<8x64xf32>
    %259 = vector.extract_strided_slice %257 {offsets = [0, 0], sizes = [8, 64], strides = [1, 1]} : vector<8x96xf32> to vector<8x64xf32>
    %260 = arith.addf %258, %259 : vector<8x64xf32>
    %261 = arith.negf %260 : vector<8x64xf32>
    %262 = math.exp %261 : vector<8x64xf32>
    %cst_59 = arith.constant 1.000000e+00 : f32
    %263 = vector.broadcast %cst_59 : f32 to vector<8x64xf32>
    %264 = arith.addf %263, %262 : vector<8x64xf32>
    %265 = arith.divf %263, %264 : vector<8x64xf32>
    %266 = vector.extract_strided_slice %265 {offsets = [0, 0], sizes = [8, 32], strides = [1, 1]} : vector<8x64xf32> to vector<8x32xf32>
    %267 = vector.extract_strided_slice %265 {offsets = [0, 32], sizes = [8, 32], strides = [1, 1]} : vector<8x64xf32> to vector<8x32xf32>
    %268 = vector.extract_strided_slice %255 {offsets = [0, 64], sizes = [8, 32], strides = [1, 1]} : vector<8x96xf32> to vector<8x32xf32>
    %269 = vector.extract_strided_slice %257 {offsets = [0, 64], sizes = [8, 32], strides = [1, 1]} : vector<8x96xf32> to vector<8x32xf32>
    %270 = vector.broadcast %17 : vector<1x32xf32> to vector<8x32xf32>
    %271 = arith.addf %269, %270 : vector<8x32xf32>
    %272 = arith.mulf %266, %271 : vector<8x32xf32>
    %273 = arith.addf %268, %272 : vector<8x32xf32>
    %274 = math.tanh %273 : vector<8x32xf32>
    %cst_60 = arith.constant 7.000000e+00 : f32
    %275 = vector.broadcast %cst_60 : f32 to vector<8x1xf32>
    %276 = arith.cmpf ogt, %29, %275 : vector<8x1xf32>
    %cst_61 = arith.constant 1.000000e+00 : f32
    %cst_62 = arith.constant 0.000000e+00 : f32
    %277 = vector.broadcast %cst_61 : f32 to vector<8x1xf32>
    %278 = vector.broadcast %cst_62 : f32 to vector<8x1xf32>
    %279 = arith.select %276, %277, %278 : vector<8x1xi1>, vector<8x1xf32>
    %cst_63 = arith.constant 1.000000e+00 : f32
    %280 = vector.broadcast %cst_63 : f32 to vector<8x32xf32>
    %281 = arith.subf %280, %267 : vector<8x32xf32>
    %282 = vector.broadcast %279 : vector<8x1xf32> to vector<8x32xf32>
    %283 = arith.mulf %282, %281 : vector<8x32xf32>
    %284 = arith.subf %274, %254 : vector<8x32xf32>
    %285 = arith.mulf %283, %284 : vector<8x32xf32>
    %286 = arith.addf %254, %285 : vector<8x32xf32>
    %287 = arith.truncf %286 : vector<8x32xf32> to vector<8x32xbf16>
    %c0_64 = arith.constant 0 : index
    %c0_65 = arith.constant 0 : index
    %288 = vector.load %arg6[%c0_64, %c0_65] : memref<64x64xbf16, #tpu.memory_space<vmem>>, vector<32x64xbf16>
    %cst_66 = arith.constant dense<0.000000e+00> : vector<8x64xf32>
    %289 = tpu.matmul %287, %288, %cst_66 {dimension_numbers = #tpu.dot_dimension_numbers<[1], [0], [0], [1], [0, 0, 1, 1], [], []>} : vector<8x32xbf16>, vector<32x64xbf16>, vector<8x64xf32> -> vector<8x64xf32>
    %c32 = arith.constant 32 : index
    %c0_67 = arith.constant 0 : index
    %290 = vector.load %arg6[%c32, %c0_67] : memref<64x64xbf16, #tpu.memory_space<vmem>>, vector<16x64xbf16>
    %cst_68 = arith.constant dense<0.000000e+00> : vector<8x64xf32>
    %291 = tpu.matmul %12, %290, %cst_68 {dimension_numbers = #tpu.dot_dimension_numbers<[1], [0], [0], [1], [0, 0, 1, 1], [], []>} : vector<8x16xbf16>, vector<16x64xbf16>, vector<8x64xf32> -> vector<8x64xf32>
    %292 = arith.addf %289, %291 : vector<8x64xf32>
    %293 = vector.broadcast %19 : vector<1x64xf32> to vector<8x64xf32>
    %294 = arith.addf %292, %293 : vector<8x64xf32>
    %c48 = arith.constant 48 : index
    %c0_69 = arith.constant 0 : index
    %295 = vector.load %arg6[%c48, %c0_69] : memref<64x64xbf16, #tpu.memory_space<vmem>>, vector<16x64xbf16>
    %cst_70 = arith.constant dense<0.000000e+00> : vector<32x64xf32>
    %296 = tpu.matmul %13, %295, %cst_70 {dimension_numbers = #tpu.dot_dimension_numbers<[1], [0], [0], [1], [0, 0, 1, 1], [], []>} : vector<32x16xbf16>, vector<16x64xbf16>, vector<32x64xf32> -> vector<32x64xf32>
    %297 = vector.shape_cast %296 : vector<32x64xf32> to vector<2x16x64xf32>
    %c0_71 = arith.constant 0 : index
    %c0_72 = arith.constant 0 : index
    %298 = vector.load %arg3[%c0_71, %c0_72] : memref<2x16xf32, #tpu.memory_space<vmem>>, vector<2x16xf32>
    %299 = vector.shape_cast %298 : vector<2x16xf32> to vector<2x16x1xf32>
    %300 = vector.extract_strided_slice %294 {offsets = [0, 0], sizes = [2, 64], strides = [1, 1]} : vector<8x64xf32> to vector<2x64xf32>
    %301 = vector.shape_cast %300 : vector<2x64xf32> to vector<2x1x64xf32>
    %302 = vector.broadcast %301 : vector<2x1x64xf32> to vector<2x16x64xf32>
    %303 = arith.addf %297, %302 : vector<2x16x64xf32>
    %304 = vector.shape_cast %18 : vector<1x64xf32> to vector<1x1x64xf32>
    %305 = vector.broadcast %299 : vector<2x16x1xf32> to vector<2x16x64xf32>
    %306 = vector.broadcast %304 : vector<1x1x64xf32> to vector<2x16x64xf32>
    %307 = arith.mulf %305, %306 : vector<2x16x64xf32>
    %308 = arith.addf %303, %307 : vector<2x16x64xf32>
    %cst_73 = arith.constant 0.000000e+00 : f32
    %309 = vector.broadcast %cst_73 : f32 to vector<2x16x64xf32>
    %310 = arith.maximumf %308, %309 : vector<2x16x64xf32>
    %c0_74 = arith.constant 0 : index
    %311 = memref.load %arg0[%c0_74] : memref<3xf32, #tpu.memory_space<smem>>
    %312 = tpu.iota {dimensions = array<i32: 1>} : vector<1x64xi32>
    %c32_i32 = arith.constant 32 : i32
    %313 = vector.broadcast %c32_i32 : i32 to vector<1x64xi32>
    %314 = arith.cmpi slt, %312, %313 : vector<1x64xi32>
    %cst_75 = arith.constant 1.000000e+00 : f32
    %315 = arith.subf %cst_75, %311 : f32
    %316 = vector.broadcast %315 : f32 to vector<1x64xf32>
    %317 = vector.broadcast %311 : f32 to vector<1x64xf32>
    %318 = arith.select %314, %316, %317 : vector<1x64xi1>, vector<1x64xf32>
    %319 = arith.mulf %20, %318 : vector<1x64xf32>
    %cst_76 = arith.constant 1.000000e+00 : f32
    %320 = arith.subf %cst_76, %311 : f32
    %c1 = arith.constant 1 : index
    %321 = memref.load %arg0[%c1] : memref<3xf32, #tpu.memory_space<smem>>
    %322 = arith.mulf %320, %321 : f32
    %c2 = arith.constant 2 : index
    %323 = memref.load %arg0[%c2] : memref<3xf32, #tpu.memory_space<smem>>
    %324 = arith.mulf %311, %323 : f32
    %325 = arith.addf %322, %324 : f32
    %326 = vector.shape_cast %319 : vector<1x64xf32> to vector<1x1x64xf32>
    %327 = vector.broadcast %326 : vector<1x1x64xf32> to vector<2x16x64xf32>
    %328 = arith.mulf %310, %327 : vector<2x16x64xf32>
    %cst_77 = arith.constant dense<0.000000e+00> : vector<2x16xf32>
    %329 = vector.multi_reduction <add>, %328, %cst_77 [2] : vector<2x16x64xf32> to vector<2x16xf32>
    %330 = vector.broadcast %325 : f32 to vector<2x16xf32>
    %331 = arith.addf %329, %330 : vector<2x16xf32>
    %c0_78 = arith.constant 0 : index
    %c0_79 = arith.constant 0 : index
    %332 = vector.load %arg8[%c0_78, %c0_79] : memref<2x16xf32, #tpu.memory_space<vmem>>, vector<2x16xf32>
    tpu.vector_store %arg8[%c0_78, %c0_79], %331 {strides = array<i32>} : memref<2x16xf32, #tpu.memory_space<vmem>>, vector<2x16xf32>,
    return
  }
}

</mosaic_0001>

<llo_original>
// kernel: generator_v4_forward.1
$region0: #{generator_v4_forward.1}
  #allocation0 [shape = 'u32[]', space=smem, size = 0x4, offset = 0x4, fixed_abs, tag = 'smem constant byte address 0x4 - core index']
  #allocation1 [shape = 'u32[72,128]{1,0:T(1,128)}', space=vmem, size = 0x9000, scoped, tag = 'internal scratch']
  %s0 = inlined_call_operand.vmem [shape: f32[3], index: 0, kind: input, shape index: {}]
  %s1 = inlined_call_operand.vmem [shape: s32[168,1], index: 1, kind: input, shape index: {}]
  %s2 = inlined_call_operand.vmem [shape: f32[8,1], index: 2, kind: input, shape index: {}]
  %s3 = inlined_call_operand.vmem [shape: f32[2,16], index: 3, kind: input, shape index: {}]
  %s4 = inlined_call_operand.vmem [shape: bf16[148,16], index: 4, kind: input, shape index: {}]
  %s5 = inlined_call_operand.vmem [shape: bf16[56,96], index: 5, kind: input, shape index: {}]
  %s6 = inlined_call_operand.vmem [shape: bf16[64,64], index: 6, kind: input, shape index: {}]
  %s7 = inlined_call_operand.vmem [shape: f32[5,96], index: 7, kind: input, shape index: {}]
  %s8 = inlined_call_operand.hbm [shape: f32[2,16], index: 8, kind: output, shape index: {}]
  %s9 = sld [smem:[#allocation0]]
  $region46: #{generator_v4_forward.1} parent=0
    _
  %s11 = ssub.s32 1, %s9
  %s12 = scalar_select 0, %s11, %s9
  $region1: #{generator_v4_forward.1} parent=0
    #allocation2 [shape = 'u8[512]{0}', space=smem, size = 0x200, scoped, tag = 'input window, operand 0, single buffered']
    #allocation3 [shape = 's32[1]{0}', space=sflag, size = 0x4, scoped, tag = 'scoped memory for generator_v4_forward.1']
    #allocation4 [shape = 's32[1]{0}', space=sflag, size = 0x4, scoped, tag = 'scoped memory for generator_v4_forward.1']
    #allocation5 [shape = 'u8[1024]{0}', space=vmem, size = 0x400, scoped, tag = 'output window, operand 0, single buffered']
    %13 = vsyncpa [#allocation4], 0
    %14 = vsyncpa [#allocation3], 0
    // Predicated region
    $region2: #{generator_v4_forward.1} parent=1 // pred_check
      _
    $region3: #{generator_v4_forward.1} parent=1 // pred_check_branch
      %16 = sbr.rel (0) target = $region5
    $region4: #{generator_v4_forward.1} parent=1 // pred_region
      %18 = vsyncadd [#allocation4], 0
      %s20 = sshll.u32 %s0, 4
      %s21 = int_to_ptr.vmem [resolvable:$true] %s20
      %23 = dma.vmem_to_smem %s21, 16, [#allocation2], [#allocation4]
    $region5: #{generator_v4_forward.1} parent=1 // pred_fallthru
      _
    // Predicated region
    $region6: #{generator_v4_forward.1} parent=1 // pred_check
      _
    $region7: #{generator_v4_forward.1} parent=1 // pred_check_branch
      %25 = sbr.rel (0) target = $region9
    $region8: #{generator_v4_forward.1} parent=1 // pred_region
      _
    $region9: #{generator_v4_forward.1} parent=1 // pred_fallthru
      _
    // Predicated region
    $region10: #{generator_v4_forward.1} parent=1 // pred_check
      _
    $region11: #{generator_v4_forward.1} parent=1 // pred_check_branch
      %27 = sbr.rel (0) target = $region13
    $region12: #{generator_v4_forward.1} parent=1 // pred_region
      _
    $region13: #{generator_v4_forward.1} parent=1 // pred_fallthru
      _
    // Predicated region
    $region14: #{generator_v4_forward.1} parent=1 // pred_check
      _
    $region15: #{generator_v4_forward.1} parent=1 // pred_check_branch
      %29 = sbr.rel (0) target = $region17
    $region16: #{generator_v4_forward.1} parent=1 // pred_region
      _
    $region17: #{generator_v4_forward.1} parent=1 // pred_fallthru
      _
    // Predicated region
    $region18: #{generator_v4_forward.1} parent=1 // pred_check
      _
    $region19: #{generator_v4_forward.1} parent=1 // pred_check_branch
      %31 = sbr.rel (0) target = $region21
    $region20: #{generator_v4_forward.1} parent=1 // pred_region
      _
    $region21: #{generator_v4_forward.1} parent=1 // pred_fallthru
      _
    // Predicated region
    $region22: #{generator_v4_forward.1} parent=1 // pred_check
      _
    $region23: #{generator_v4_forward.1} parent=1 // pred_check_branch
      %33 = sbr.rel (0) target = $region25
    $region24: #{generator_v4_forward.1} parent=1 // pred_region
      _
    $region25: #{generator_v4_forward.1} parent=1 // pred_fallthru
      _
    // Predicated region
    $region26: #{generator_v4_forward.1} parent=1 // pred_check
      _
    $region27: #{generator_v4_forward.1} parent=1 // pred_check_branch
      %35 = sbr.rel (0) target = $region29
    $region28: #{generator_v4_forward.1} parent=1 // pred_region
      _
    $region29: #{generator_v4_forward.1} parent=1 // pred_fallthru
      _
    // Predicated region
    $region30: #{generator_v4_forward.1} parent=1 // pred_check
      _
    $region31: #{generator_v4_forward.1} parent=1 // pred_check_branch
      %37 = sbr.rel (0) target = $region33
    $region32: #{generator_v4_forward.1} parent=1 // pred_region
      _
    $region33: #{generator_v4_forward.1} parent=1 // pred_fallthru
      _
    // Predicated region
    $region34: #{generator_v4_forward.1} parent=1 // pred_check
      _
    $region35: #{generator_v4_forward.1} parent=1 // pred_check_branch
      %39 = sbr.rel (0) target = $region37
    $region36: #{generator_v4_forward.1} parent=1 // pred_region
      %41 = dma.done [#allocation4], 16
    $region37: #{generator_v4_forward.1} parent=1 // pred_fallthru
      _
    %42 = sfence
    %v44 = vld [vmem:[%s1] sm:$0xff]
    %v45 = vld [vmem:[%s1 + $0x8] sm:$0xff]
    %v46 = vld [vmem:[%s1 + $0x10] sm:$0xff]
    %v47 = vld [vmem:[%s1 + $0x18] sm:$0xff]
    %v48 = vld [vmem:[%s1 + $0x20] sm:$0xff]
    %v49 = vld [vmem:[%s1 + $0x28] sm:$0xff]
    %v50 = vld [vmem:[%s1 + $0x30] sm:$0xff]
    %v51 = vld [vmem:[%s1 + $0x38] sm:$0xff]
    %v52 = vld [vmem:[%s1 + $0x40] sm:$0xff]
    %v53 = vld [vmem:[%s1 + $0x48] sm:$0xff]
    %v54 = vld [vmem:[%s1 + $0x50] sm:$0xff]
    %v55 = vld [vmem:[%s1 + $0x58] sm:$0xff]
    %v56 = vld [vmem:[%s1 + $0x60] sm:$0xff]
    %v57 = vld [vmem:[%s1 + $0x68] sm:$0xff]
    %v58 = vld [vmem:[%s1 + $0x70] sm:$0xff]
    %v59 = vld [vmem:[%s1 + $0x78] sm:$0xff]
    %v60 = vld [vmem:[%s1 + $0x80] sm:$0xff]
    %v61 = vld [vmem:[%s1 + $0x88] sm:$0xff]
    %v62 = vld [vmem:[%s1 + $0x90] sm:$0xff]
    %v63 = vld [vmem:[%s1 + $0x98] sm:$0xff]
    %v64 = vld [vmem:[%s1 + $0xa0] sm:$0xff]
    %v65 = vlaneseq
    %v66 = vand.u32 %v65, 127
    %v67 = vadd.s32 %v66, 128
    %68 = vset.pattern.permute.xlu0 0
    %69 = vperm.xlu0 %68, %v44
    %v70 = vpop.permute.xlu0 %69
    %71 = vset.pattern.permute.xlu0 0
    %72 = vperm.xlu0 %71, %v45
    %v73 = vpop.permute.xlu0 %72
    %74 = vset.pattern.permute.xlu0 0
    %75 = vperm.xlu0 %74, %v46
    %v76 = vpop.permute.xlu0 %75
    %77 = vset.pattern.permute.xlu0 0
    %78 = vperm.xlu0 %77, %v47
    %v79 = vpop.permute.xlu0 %78
    %80 = vset.pattern.permute.xlu0 0
    %81 = vperm.xlu0 %80, %v48
    %v82 = vpop.permute.xlu0 %81
    %83 = vset.pattern.permute.xlu0 0
    %84 = vperm.xlu0 %83, %v49
    %v85 = vpop.permute.xlu0 %84
    %86 = vset.pattern.permute.xlu0 0
    %87 = vperm.xlu0 %86, %v50
    %v88 = vpop.permute.xlu0 %87
    %89 = vset.pattern.permute.xlu0 0
    %90 = vperm.xlu0 %89, %v51
    %v91 = vpop.permute.xlu0 %90
    %92 = vset.pattern.permute.xlu0 0
    %93 = vperm.xlu0 %92, %v52
    %v94 = vpop.permute.xlu0 %93
    %95 = vset.pattern.permute.xlu0 0
    %96 = vperm.xlu0 %95, %v53
    %v97 = vpop.permute.xlu0 %96
    %98 = vset.pattern.permute.xlu0 0
    %99 = vperm.xlu0 %98, %v54
    %v100 = vpop.permute.xlu0 %99
    %101 = vset.pattern.permute.xlu0 0
    %102 = vperm.xlu0 %101, %v55
    %v103 = vpop.permute.xlu0 %102
    %104 = vset.pattern.permute.xlu0 0
    %105 = vperm.xlu0 %104, %v56
    %v106 = vpop.permute.xlu0 %105
    %107 = vset.pattern.permute.xlu0 0
    %108 = vperm.xlu0 %107, %v57
    %v109 = vpop.permute.xlu0 %108
    %110 = vset.pattern.permute.xlu0 0
    %111 = vperm.xlu0 %110, %v58
    %v112 = vpop.permute.xlu0 %111
    %113 = vset.pattern.permute.xlu0 0
    %114 = vperm.xlu0 %113, %v59
    %v115 = vpop.permute.xlu0 %114
    %116 = vset.pattern.permute.xlu0 0
    %117 = vperm.xlu0 %116, %v60
    %v118 = vpop.permute.xlu0 %117
    %119 = vset.pattern.permute.xlu0 0
    %120 = vperm.xlu0 %119, %v61
    %v121 = vpop.permute.xlu0 %120
    %122 = vset.pattern.permute.xlu0 0
    %123 = vperm.xlu0 %122, %v62
    %v124 = vpop.permute.xlu0 %123
    %125 = vset.pattern.permute.xlu0 0
    %126 = vperm.xlu0 %125, %v63
    %v127 = vpop.permute.xlu0 %126
    %128 = vset.pattern.permute.xlu0 0
    %129 = vperm.xlu0 %128, %v64
    %v130 = vpop.permute.xlu0 %129
    %vm131 = vcmp.eq.s32.totalorder %v70, %v66
    %vm132 = vcmp.eq.s32.totalorder %v70, %v67
    %vm133 = vcmp.eq.s32.totalorder %v73, %v66
    %vm134 = vcmp.eq.s32.totalorder %v73, %v67
    %vm135 = vcmp.eq.s32.totalorder %v76, %v66
    %vm136 = vcmp.eq.s32.totalorder %v76, %v67
    %vm137 = vcmp.eq.s32.totalorder %v79, %v66
    %vm138 = vcmp.eq.s32.totalorder %v79, %v67
    %vm139 = vcmp.eq.s32.totalorder %v82, %v66
    %vm140 = vcmp.eq.s32.totalorder %v82, %v67
    %vm141 = vcmp.eq.s32.totalorder %v85, %v66
    %vm142 = vcmp.eq.s32.totalorder %v85, %v67
    %vm143 = vcmp.eq.s32.totalorder %v88, %v66
    %vm144 = vcmp.eq.s32.totalorder %v88, %v67
    %vm145 = vcmp.eq.s32.totalorder %v91, %v66
    %vm146 = vcmp.eq.s32.totalorder %v91, %v67
    %vm147 = vcmp.eq.s32.totalorder %v94, %v66
    %vm148 = vcmp.eq.s32.totalorder %v94, %v67
    %vm149 = vcmp.eq.s32.totalorder %v97, %v66
    %vm150 = vcmp.eq.s32.totalorder %v97, %v67
    %vm151 = vcmp.eq.s32.totalorder %v100, %v66
    %vm152 = vcmp.eq.s32.totalorder %v100, %v67
    %vm153 = vcmp.eq.s32.totalorder %v103, %v66
    %vm154 = vcmp.eq.s32.totalorder %v103, %v67
    %vm155 = vcmp.eq.s32.totalorder %v106, %v66
    %vm156 = vcmp.eq.s32.totalorder %v106, %v67
    %vm157 = vcmp.eq.s32.totalorder %v109, %v66
    %vm158 = vcmp.eq.s32.totalorder %v109, %v67
    %vm159 = vcmp.eq.s32.totalorder %v112, %v66
    %vm160 = vcmp.eq.s32.totalorder %v112, %v67
    %vm161 = vcmp.eq.s32.totalorder %v115, %v66
    %vm162 = vcmp.eq.s32.totalorder %v115, %v67
    %vm163 = vcmp.eq.s32.totalorder %v118, %v66
    %vm164 = vcmp.eq.s32.totalorder %v118, %v67
    %vm165 = vcmp.eq.s32.totalorder %v121, %v66
    %vm166 = vcmp.eq.s32.totalorder %v121, %v67
    %vm167 = vcmp.eq.s32.totalorder %v124, %v66
    %vm168 = vcmp.eq.s32.totalorder %v124, %v67
    %vm169 = vcmp.eq.s32.totalorder %v127, %v66
    %vm170 = vcmp.eq.s32.totalorder %v127, %v67
    %vm171 = vcmp.eq.s32.totalorder %v130, %v66
    %vm172 = vcmp.eq.s32.totalorder %v130, %v67
    %v173 = vsel %vm131, 1.0, 0.0
    %v174 = vsel %vm132, 1.0, 0.0
    %v175 = vsel %vm133, 1.0, 0.0
    %v176 = vsel %vm134, 1.0, 0.0
    %v177 = vsel %vm135, 1.0, 0.0
    %v178 = vsel %vm136, 1.0, 0.0
    %v179 = vsel %vm137, 1.0, 0.0
    %v180 = vsel %vm138, 1.0, 0.0
    %v181 = vsel %vm139, 1.0, 0.0
    %v182 = vsel %vm140, 1.0, 0.0
    %v183 = vsel %vm141, 1.0, 0.0
    %v184 = vsel %vm142, 1.0, 0.0
    %v185 = vsel %vm143, 1.0, 0.0
    %v186 = vsel %vm144, 1.0, 0.0
    %v187 = vsel %vm145, 1.0, 0.0
    %v188 = vsel %vm146, 1.0, 0.0
    %v189 = vsel %vm147, 1.0, 0.0
    %v190 = vsel %vm148, 1.0, 0.0
    %v191 = vsel %vm149, 1.0, 0.0
    %v192 = vsel %vm150, 1.0, 0.0
    %v193 = vsel %vm151, 1.0, 0.0
    %v194 = vsel %vm152, 1.0, 0.0
    %v195 = vsel %vm153, 1.0, 0.0
    %v196 = vsel %vm154, 1.0, 0.0
    %v197 = vsel %vm155, 1.0, 0.0
    %v198 = vsel %vm156, 1.0, 0.0
    %v199 = vsel %vm157, 1.0, 0.0
    %v200 = vsel %vm158, 1.0, 0.0
    %v201 = vsel %vm159, 1.0, 0.0
    %v202 = vsel %vm160, 1.0, 0.0
    %v203 = vsel %vm161, 1.0, 0.0
    %v204 = vsel %vm162, 1.0, 0.0
    %v205 = vsel %vm163, 1.0, 0.0
    %v206 = vsel %vm164, 1.0, 0.0
    %v207 = vsel %vm165, 1.0, 0.0
    %v208 = vsel %vm166, 1.0, 0.0
    %v209 = vsel %vm167, 1.0, 0.0
    %v210 = vsel %vm168, 1.0, 0.0
    %v211 = vsel %vm169, 1.0, 0.0
    %v212 = vsel %vm170, 1.0, 0.0
    %v213 = vsel %vm171, 1.0, 0.0
    %v214 = vsel %vm172, 1.0, 0.0
    %v215 = vpack.c.bf16 %v175, %v173
    %v216 = vpack.c.bf16 %v176, %v174
    %v217 = vpack.c.bf16 %v179, %v177
    %v218 = vpack.c.bf16 %v180, %v178
    %v219 = vpack.c.bf16 %v183, %v181
    %v220 = vpack.c.bf16 %v184, %v182
    %v221 = vpack.c.bf16 %v187, %v185
    %v222 = vpack.c.bf16 %v188, %v186
    %v223 = vpack.c.bf16 %v191, %v189
    %v224 = vpack.c.bf16 %v192, %v190
    %v225 = vpack.c.bf16 %v195, %v193
    %v226 = vpack.c.bf16 %v196, %v194
    %v227 = vpack.c.bf16 %v199, %v197
    %v228 = vpack.c.bf16 %v200, %v198
    %v229 = vpack.c.bf16 %v203, %v201
    %v230 = vpack.c.bf16 %v204, %v202
    %v231 = vpack.c.bf16 %v207, %v205
    %v232 = vpack.c.bf16 %v208, %v206
    %v233 = vpack.c.bf16 %v211, %v209
    %v234 = vpack.c.bf16 %v212, %v210
    %v235 = vpack.c.bf16 %v213, %v213
    %v236 = vpack.c.bf16 %v214, %v214
    %v237 = vld [vmem:[%s4] sm:$0xf]
    %v238 = vld [vmem:[%s4 + $0x4] sm:$0xf]
    %v239 = vld [vmem:[%s4 + $0x8] sm:$0xf]
    %v240 = vld [vmem:[%s4 + $0xc] sm:$0xf]
    %v241 = vld [vmem:[%s4 + $0x10] sm:$0xf]
    %v242 = vld [vmem:[%s4 + $0x14] sm:$0xf]
    %v243 = vld [vmem:[%s4 + $0x18] sm:$0xf]
    %v244 = vld [vmem:[%s4 + $0x1c] sm:$0xf]
    %v245 = vld [vmem:[%s4 + $0x20] sm:$0xf]
    %v246 = vld [vmem:[%s4 + $0x24] sm:$0xf]
    %v247 = vld [vmem:[%s4 + $0x28] sm:$0xf]
    %v248 = vld [vmem:[%s4 + $0x2c] sm:$0xf]
    %v249 = vld [vmem:[%s4 + $0x30] sm:$0xf]
    %v250 = vld [vmem:[%s4 + $0x34] sm:$0xf]
    %v251 = vld [vmem:[%s4 + $0x38] sm:$0xf]
    %v252 = vld [vmem:[%s4 + $0x3c] sm:$0xf]
    %v253 = vld [vmem:[%s4 + $0x40] sm:$0xf]
    %v254 = vld [vmem:[%s4 + $0x44] sm:$0xf]
    %v255 = vld [vmem:[%s4 + $0x48] sm:$0x3]
    %v275 = vunpack.c.l.b16 %v237
    %v276 = vunpack.c.l.b16 %v238
    %v277 = vunpack.c.l.b16 %v239
    %v278 = vunpack.c.l.b16 %v240
    %v279 = vunpack.c.l.b16 %v241
    %v280 = vunpack.c.l.b16 %v242
    %v281 = vunpack.c.l.b16 %v243
    %v282 = vunpack.c.l.b16 %v244
    %v283 = vunpack.c.l.b16 %v245
    %v284 = vunpack.c.l.b16 %v246
    %v285 = vunpack.c.l.b16 %v247
    %v286 = vunpack.c.l.b16 %v248
    %v287 = vunpack.c.l.b16 %v249
    %v288 = vunpack.c.l.b16 %v250
    %v289 = vunpack.c.l.b16 %v251
    %v290 = vunpack.c.l.b16 %v252
    %v291 = vunpack.c.l.b16 %v253
    %v292 = vunpack.c.l.b16 %v254
    %v293 = vunpack.c.l.b16 %v255
    %v294 = vpack.c.b16 %v276, %v275
    %v295 = vpack.c.b16 %v278, %v277
    %v296 = vpack.c.b16 %v280, %v279
    %v297 = vpack.c.b16 %v282, %v281
    %v298 = vpack.c.b16 %v284, %v283
    %v299 = vpack.c.b16 %v286, %v285
    %v300 = vpack.c.b16 %v288, %v287
    %v301 = vpack.c.b16 %v290, %v289
    %v302 = vpack.c.b16 %v292, %v291
    %v303 = vpack.c.b16 %v293, %v293
    %vm313 = vcmask 162816
    %v315 = vsel %vm313, %v216, 0
    %v318 = vsel %vm313, %v218, 0
    %v321 = vsel %vm313, %v220, 0
    %v324 = vsel %vm313, %v222, 0
    %v327 = vsel %vm313, %v224, 0
    %v330 = vsel %vm313, %v226, 0
    %v333 = vsel %vm313, %v228, 0
    %v336 = vsel %vm313, %v230, 0
    %v339 = vsel %vm313, %v232, 0
    %v342 = vsel %vm313, %v234, 0
    %v345 = vsel %vm313, %v236, 0
    %vm347 = vcmask 1041408
    %v349 = vsel %vm347, %v303, 0
    %351 = vmatpush.bf16.msra.mxu0 %v301
    %352 = vmatpush.bf16.msra.mxu0 %v300
    %353 = vmatpush.bf16.msra.mxu0 %v299
    %354 = vmatpush.bf16.msra.mxu0 %v298
    %355 = vmatpush.bf16.msra.mxu0 %v297
    %356 = vmatpush.bf16.msra.mxu0 %v296
    %357 = vmatpush.bf16.msra.mxu0 %v295
    %358 = vmatpush.bf16.msra.mxu0 %v294
    %359 = vmatmul.bf16.gmra.mxu0 %v215
    %v360 = vpop.f32.mrf.mxu0
    %v361 = vadd.f32 0.0, %v360
    %v362 = vpop.f32.mrf.mxu0
    %v363 = vadd.f32 0.0, %v362
    %364 = vmatmul.bf16.gmra.mxu0 %v217
    %v365 = vpop.f32.mrf.mxu0
    %v366 = vadd.f32 0.0, %v365
    %v367 = vpop.f32.mrf.mxu0
    %v368 = vadd.f32 0.0, %v367
    %369 = vmatmul.bf16.gmra.mxu0 %v219
    %v370 = vpop.f32.mrf.mxu0
    %v371 = vadd.f32 0.0, %v370
    %v372 = vpop.f32.mrf.mxu0
    %v373 = vadd.f32 0.0, %v372
    %374 = vmatmul.bf16.gmra.mxu0 %v221
    %v375 = vpop.f32.mrf.mxu0
    %v376 = vadd.f32 0.0, %v375
    %v377 = vpop.f32.mrf.mxu0
    %v378 = vadd.f32 0.0, %v377
    %379 = vmatmul.bf16.gmra.mxu0 %v223
    %v380 = vpop.f32.mrf.mxu0
    %v381 = vadd.f32 0.0, %v380
    %v382 = vpop.f32.mrf.mxu0
    %v383 = vadd.f32 0.0, %v382
    %384 = vmatmul.bf16.gmra.mxu0 %v225
    %v385 = vpop.f32.mrf.mxu0
    %v386 = vadd.f32 0.0, %v385
    %v387 = vpop.f32.mrf.mxu0
    %v388 = vadd.f32 0.0, %v387
    %389 = vmatmul.bf16.gmra.mxu0 %v227
    %v390 = vpop.f32.mrf.mxu0
    %v391 = vadd.f32 0.0, %v390
    %v392 = vpop.f32.mrf.mxu0
    %v393 = vadd.f32 0.0, %v392
    %394 = vmatmul.bf16.gmra.mxu0 %v229
    %v395 = vpop.f32.mrf.mxu0
    %v396 = vadd.f32 0.0, %v395
    %v397 = vpop.f32.mrf.mxu0
    %v398 = vadd.f32 0.0, %v397
    %399 = vmatmul.bf16.gmra.mxu0 %v231
    %v400 = vpop.f32.mrf.mxu0
    %v401 = vadd.f32 0.0, %v400
    %v402 = vpop.f32.mrf.mxu0
    %v403 = vadd.f32 0.0, %v402
    %404 = vmatmul.bf16.gmra.mxu0 %v233
    %v405 = vpop.f32.mrf.mxu0
    %v406 = vadd.f32 0.0, %v405
    %v407 = vpop.f32.mrf.mxu0
    %v408 = vadd.f32 0.0, %v407
    %409 = vmatmul.bf16.gmra.mxu0 %v235
    %v410 = vpop.f32.mrf.mxu0
    %v411 = vadd.f32 0.0, %v410
    %v412 = vpop.f32.mrf.mxu0
    %413 = vdwg.mxu0
    %414 = vmatpush.bf16.msra.mxu0 0
    %415 = vmatpush.bf16.msra.mxu0 0
    %416 = vmatpush.bf16.msra.mxu0 0
    %417 = vmatpush.bf16.msra.mxu0 0
    %418 = vmatpush.bf16.msra.mxu0 0
    %419 = vmatpush.bf16.msra.mxu0 0
    %420 = vmatpush.bf16.msra.mxu0 %v349
    %421 = vmatpush.bf16.msra.mxu0 %v302
    %422 = vmatmul.bf16.gmra.mxu0 %v315
    %v423 = vpop.f32.mrf.mxu0
    %v424 = vadd.f32 %v361, %v423
    %v425 = vpop.f32.mrf.mxu0
    %v426 = vadd.f32 %v363, %v425
    %427 = vmatmul.bf16.gmra.mxu0 %v318
    %v428 = vpop.f32.mrf.mxu0
    %v429 = vadd.f32 %v366, %v428
    %v430 = vpop.f32.mrf.mxu0
    %v431 = vadd.f32 %v368, %v430
    %432 = vmatmul.bf16.gmra.mxu0 %v321
    %v433 = vpop.f32.mrf.mxu0
    %v434 = vadd.f32 %v371, %v433
    %v435 = vpop.f32.mrf.mxu0
    %v436 = vadd.f32 %v373, %v435
    %437 = vmatmul.bf16.gmra.mxu0 %v324
    %v438 = vpop.f32.mrf.mxu0
    %v439 = vadd.f32 %v376, %v438
    %v440 = vpop.f32.mrf.mxu0
    %v441 = vadd.f32 %v378, %v440
    %442 = vmatmul.bf16.gmra.mxu0 %v327
    %v443 = vpop.f32.mrf.mxu0
    %v444 = vadd.f32 %v381, %v443
    %v445 = vpop.f32.mrf.mxu0
    %v446 = vadd.f32 %v383, %v445
    %447 = vmatmul.bf16.gmra.mxu0 %v330
    %v448 = vpop.f32.mrf.mxu0
    %v449 = vadd.f32 %v386, %v448
    %v450 = vpop.f32.mrf.mxu0
    %v451 = vadd.f32 %v388, %v450
    %452 = vmatmul.bf16.gmra.mxu0 %v333
    %v453 = vpop.f32.mrf.mxu0
    %v454 = vadd.f32 %v391, %v453
    %v455 = vpop.f32.mrf.mxu0
    %v456 = vadd.f32 %v393, %v455
    %457 = vmatmul.bf16.gmra.mxu0 %v336
    %v458 = vpop.f32.mrf.mxu0
    %v459 = vadd.f32 %v396, %v458
    %v460 = vpop.f32.mrf.mxu0
    %v461 = vadd.f32 %v398, %v460
    %462 = vmatmul.bf16.gmra.mxu0 %v339
    %v463 = vpop.f32.mrf.mxu0
    %v464 = vadd.f32 %v401, %v463
    %v465 = vpop.f32.mrf.mxu0
    %v466 = vadd.f32 %v403, %v465
    %467 = vmatmul.bf16.gmra.mxu0 %v342
    %v468 = vpop.f32.mrf.mxu0
    %v469 = vadd.f32 %v406, %v468
    %v470 = vpop.f32.mrf.mxu0
    %v471 = vadd.f32 %v408, %v470
    %472 = vmatmul.bf16.gmra.mxu0 %v345
    %v473 = vpop.f32.mrf.mxu0
    %v474 = vadd.f32 %v411, %v473
    %v475 = vpop.f32.mrf.mxu0
    %476 = vdwg.mxu0
    %v477 = vpack.c.bf16 %v424, %v424
    %v478 = vpack.c.bf16 %v426, %v426
    %v479 = vpack.c.bf16 %v429, %v429
    %v480 = vpack.c.bf16 %v431, %v431
    %v481 = vpack.c.bf16 %v434, %v434
    %v482 = vpack.c.bf16 %v436, %v436
    %v483 = vpack.c.bf16 %v439, %v439
    %v484 = vpack.c.bf16 %v441, %v441
    %v485 = vpack.c.bf16 %v444, %v444
    %v486 = vpack.c.bf16 %v446, %v446
    %v487 = vpack.c.bf16 %v449, %v449
    %v488 = vpack.c.bf16 %v451, %v451
    %v489 = vpack.c.bf16 %v454, %v454
    %v490 = vpack.c.bf16 %v456, %v456
    %v491 = vpack.c.bf16 %v459, %v459
    %v492 = vpack.c.bf16 %v461, %v461
    %v493 = vpack.c.bf16 %v464, %v464
    %v494 = vpack.c.bf16 %v466, %v466
    %v495 = vpack.c.bf16 %v469, %v469
    %v496 = vpack.c.bf16 %v471, %v471
    %v497 = vpack.c.bf16 %v474, %v474
    %v498 = vld [vmem:[%s7] sm:$0x1f]
    %v499 = vld [vmem:[%s5] sm:$0xf]
    %v500 = vld [vmem:[%s5 + $0x4] sm:$0xf]
    %v501 = vld [vmem:[%s5 + $0x8] sm:$0xf]
    %v510 = vunpack.c.l.b16 %v490
    %v511 = vunpack.c.l.b16 %v491
    %v512 = vunpack.c.l.b16 %v492
    %v513 = vunpack.c.l.b16 %v493
    %v514 = vunpack.c.l.b16 %v494
    %v515 = vunpack.c.l.b16 %v495
    %v516 = vunpack.c.l.b16 %v496
    %v517 = vunpack.c.l.b16 %v497
    %v518 = vpack.c.b16 %v511, %v510
    %v519 = vpack.c.b16 %v513, %v512
    %v520 = vpack.c.b16 %v515, %v514
    %v521 = vpack.c.b16 %v517, %v516
    %vm522 = vcmask 64512
    %v524 = vsel %vm522, %v518, 0
    %v527 = vsel %vm522, %v519, 0
    %v530 = vsel %vm522, %v520, 0
    %v533 = vsel %vm522, %v521, 0
    %vm535 = vcmask 1043456
    %v537 = vsel %vm535, %v501, 0
    %539 = vmatpush.bf16.msra.mxu0 0
    %540 = vmatpush.bf16.msra.mxu0 0
    %541 = vmatpush.bf16.msra.mxu0 0
    %542 = vmatpush.bf16.msra.mxu0 0
    %543 = vmatpush.bf16.msra.mxu0 0
    %544 = vmatpush.bf16.msra.mxu0 0
    %545 = vmatpush.bf16.msra.mxu0 0
    %546 = vmatpush.bf16.msra.mxu0 %v537
    %547 = vmatmul.bf16.gmra.mxu0 %v524
    %v548 = vpop.f32.mrf.mxu0
    %v549 = vadd.f32 0.0, %v548
    %v550 = vpop.f32.mrf.mxu0
    %v551 = vadd.f32 0.0, %v550
    %552 = vmatmul.bf16.gmra.mxu0 %v527
    %v553 = vpop.f32.mrf.mxu0
    %v554 = vadd.f32 0.0, %v553
    %v555 = vpop.f32.mrf.mxu0
    %v556 = vadd.f32 0.0, %v555
    %557 = vmatmul.bf16.gmra.mxu0 %v530
    %v558 = vpop.f32.mrf.mxu0
    %v559 = vadd.f32 0.0, %v558
    %v560 = vpop.f32.mrf.mxu0
    %v561 = vadd.f32 0.0, %v560
    %562 = vmatmul.bf16.gmra.mxu0 %v533
    %v563 = vpop.f32.mrf.mxu0
    %v564 = vadd.f32 0.0, %v563
    %v565 = vpop.f32.mrf.mxu0
    %v566 = vadd.f32 0.0, %v565
    %567 = vdwg.mxu0
    %v576 = vunpack.c.l.b16 %v477
    %v577 = vunpack.c.l.b16 %v478
    %v578 = vunpack.c.l.b16 %v479
    %v579 = vunpack.c.l.b16 %v480
    %v580 = vunpack.c.l.b16 %v481
    %v581 = vunpack.c.l.b16 %v482
    %v582 = vunpack.c.l.b16 %v483
    %v583 = vunpack.c.l.b16 %v484
    %v584 = vpack.c.b16 %v577, %v576
    %v585 = vpack.c.b16 %v579, %v578
    %v586 = vpack.c.b16 %v581, %v580
    %v587 = vpack.c.b16 %v583, %v582
    %v590 = vunpack.c.l.b16 %v499
    %v591 = vunpack.c.l.b16 %v500
    %v592 = vpack.c.b16 %v591, %v590
    %vm594 = vcmask 130048
    %v596 = vsel %vm594, %v584, 0
    %v599 = vsel %vm594, %v585, 0
    %v602 = vsel %vm594, %v586, 0
    %v605 = vsel %vm594, %v587, 0
    %607 = vmatpush.bf16.msra.mxu0 0
    %608 = vmatpush.bf16.msra.mxu0 0
    %609 = vmatpush.bf16.msra.mxu0 0
    %610 = vmatpush.bf16.msra.mxu0 0
    %611 = vmatpush.bf16.msra.mxu0 0
    %612 = vmatpush.bf16.msra.mxu0 0
    %613 = vmatpush.bf16.msra.mxu0 0
    %614 = vmatpush.bf16.msra.mxu0 %v592
    %615 = vmatmul.bf16.gmra.mxu0 %v596
    %v616 = vpop.f32.mrf.mxu0
    %v617 = vadd.f32 %v549, %v616
    %v618 = vpop.f32.mrf.mxu0
    %v619 = vadd.f32 %v551, %v618
    %620 = vmatmul.bf16.gmra.mxu0 %v599
    %v621 = vpop.f32.mrf.mxu0
    %v622 = vadd.f32 %v554, %v621
    %v623 = vpop.f32.mrf.mxu0
    %v624 = vadd.f32 %v556, %v623
    %625 = vmatmul.bf16.gmra.mxu0 %v602
    %v626 = vpop.f32.mrf.mxu0
    %v627 = vadd.f32 %v559, %v626
    %v628 = vpop.f32.mrf.mxu0
    %v629 = vadd.f32 %v561, %v628
    %630 = vmatmul.bf16.gmra.mxu0 %v605
    %v631 = vpop.f32.mrf.mxu0
    %v632 = vadd.f32 %v564, %v631
    %v633 = vpop.f32.mrf.mxu0
    %v634 = vadd.f32 %v566, %v633
    %635 = vdwg.mxu0
    %v636 = vperm.slane %v498, 0
    %v637 = vadd.f32 %v617, %v636
    %v638 = vadd.f32 %v619, %v636
    %v639 = vadd.f32 %v622, %v636
    %v640 = vadd.f32 %v624, %v636
    %v641 = vadd.f32 %v627, %v636
    %v642 = vadd.f32 %v629, %v636
    %v643 = vadd.f32 %v632, %v636
    %v644 = vadd.f32 %v634, %v636
    %v645 = vld [vmem:[%s5 + $0xc] sm:$0xf]
    %v646 = vld [vmem:[%s5 + $0x10] sm:$0xf]
    %v647 = vld [vmem:[%s5 + $0x14] sm:$0xf]
    %v648 = vld [vmem:[%s5 + $0x18] sm:$0xf]
    %v649 = vld [vmem:[%s2] sm:$0xff]
    %v654 = vunpack.c.l.b16 %v645
    %v655 = vunpack.c.l.b16 %v646
    %v656 = vunpack.c.l.b16 %v647
    %v657 = vunpack.c.l.b16 %v648
    %v658 = vpack.c.b16 %v655, %v654
    %v659 = vpack.c.b16 %v657, %v656
    %vm662 = vcmask 261120
    %v664 = vsel %vm662, 0, 0
    %666 = vmatpush.bf16.msra.mxu0 0
    %667 = vmatpush.bf16.msra.mxu0 0
    %668 = vmatpush.bf16.msra.mxu0 0
    %669 = vmatpush.bf16.msra.mxu0 0
    %670 = vmatpush.bf16.msra.mxu0 0
    %671 = vmatpush.bf16.msra.mxu0 0
    %672 = vmatpush.bf16.msra.mxu0 %v659
    %673 = vmatpush.bf16.msra.mxu0 %v658
    %674 = vmatmul.bf16.gmra.mxu0 %v664
    %v675 = vpop.f32.mrf.mxu0
    %v676 = vadd.f32 0.0, %v675
    %v677 = vpop.f32.mrf.mxu0
    %678 = vdwg.mxu0
    %v679 = vadd.f32 %v637, %v676
    %v680 = vxor.u32 %v679, 2147483648
    %v681 = vmul.f32 %v680, 1.442695
    %v682 = vpow.pop %v681
    %v683 = vadd.f32 %v682, 1.0
    %v684 = vrcp.pop %v683
    %v685 = vmul.f32 %v683, %v684
    %v686 = vsub.f32 1.0, %v685
    %v687 = vmul.f32 %v684, %v686
    %v688 = vadd.f32 %v684, %v687
    %vm689 = vweird.f32 %v683
    %vm690 = vweird.f32 %v684
    %vm691 = vmor %vm689, %vm690
    %v692 = vsel %vm691, %v684, %v688
    %v693 = vand.u32 2147483647, %v683
    %vm694 = vcmp.eq.f32.partialorder %v693, 8.507059e+37
    %v695 = vand.u32 %v683, 2147483648
    %v696 = vor.u32 1.1754944e-38, %v695
    %v697 = vsel %vm694, %v696, %v692
    %v698 = vmul.f32 1.0, %v697
    %v699 = vperm.slane %v498, 1
    %701 = vrot.lane.b32.xlu0 %v699, 64
    %v702 = vpop.permute.xlu0 %701
    %v704 = vadd.f32 %v676, %v702
    %706 = vrot.lane.b32.xlu0 %v704, 64
    %v707 = vpop.permute.xlu0 %706
    %v709 = vmul.f32 %v698, %v707
    %711 = vrot.lane.b32.xlu0 %v709, 64
    %v712 = vpop.permute.xlu0 %711
    %v714 = vadd.f32 %v637, %v712
    %v715 = vtanh.pop %v714
    %vm716 = vcmp.gt.f32.partialorder %v649, 0.0
    %v717 = vsel %vm716, 1.0, 0.0
    %v718 = vsub.f32 1.0, %v698
    %720 = vset.pattern.permute.xlu0 0
    %721 = vperm.xlu0 %720, %v717
    %v722 = vpop.permute.xlu0 %721
    %v724 = vmul.f32 %v722, %v718
    %726 = vrot.lane.b32.xlu0 %v715, 96
    %v727 = vpop.permute.xlu0 %726
    %v729 = vmul.f32 %v724, %v727
    %v730 = vadd.f32 %v729, 0.0
    %v731 = vpack.c.bf16 %v730, %v730
    %733 = vrot.lane.b32.xlu0 %v731, 96
    %v734 = vpop.permute.xlu0 %733
    %v736 = vsel %vm662, %v734, 0
    %738 = vmatpush.bf16.msra.mxu0 0
    %739 = vmatpush.bf16.msra.mxu0 0
    %740 = vmatpush.bf16.msra.mxu0 0
    %741 = vmatpush.bf16.msra.mxu0 0
    %742 = vmatpush.bf16.msra.mxu0 0
    %743 = vmatpush.bf16.msra.mxu0 0
    %744 = vmatpush.bf16.msra.mxu0 %v659
    %745 = vmatpush.bf16.msra.mxu0 %v658
    %746 = vmatmul.bf16.gmra.mxu0 %v736
    %v747 = vpop.f32.mrf.mxu0
    %v748 = vadd.f32 0.0, %v747
    %v749 = vpop.f32.mrf.mxu0
    %750 = vdwg.mxu0
    %v751 = vadd.f32 %v638, %v748
    %v752 = vxor.u32 %v751, 2147483648
    %v753 = vmul.f32 %v752, 1.442695
    %v754 = vpow.pop %v753
    %v755 = vadd.f32 %v754, 1.0
    %v756 = vrcp.pop %v755
    %v757 = vmul.f32 %v755, %v756
    %v758 = vsub.f32 1.0, %v757
    %v759 = vmul.f32 %v756, %v758
    %v760 = vadd.f32 %v756, %v759
    %vm761 = vweird.f32 %v755
    %vm762 = vweird.f32 %v756
    %vm763 = vmor %vm761, %vm762
    %v764 = vsel %vm763, %v756, %v760
    %v765 = vand.u32 2147483647, %v755
    %vm766 = vcmp.eq.f32.partialorder %v765, 8.507059e+37
    %v767 = vand.u32 %v755, 2147483648
    %v768 = vor.u32 1.1754944e-38, %v767
    %v769 = vsel %vm766, %v768, %v764
    %v770 = vmul.f32 1.0, %v769
    %v771 = vadd.f32 %v748, %v702
    %773 = vrot.lane.b32.xlu0 %v771, 64
    %v774 = vpop.permute.xlu0 %773
    %v776 = vmul.f32 %v770, %v774
    %778 = vrot.lane.b32.xlu0 %v776, 64
    %v779 = vpop.permute.xlu0 %778
    %v781 = vadd.f32 %v638, %v779
    %v782 = vtanh.pop %v781
    %vm783 = vcmp.gt.f32.partialorder %v649, 1.0
    %v784 = vsel %vm783, 1.0, 0.0
    %v785 = vsub.f32 1.0, %v770
    %787 = vset.pattern.permute.xlu0 0
    %788 = vperm.xlu0 %787, %v784
    %v789 = vpop.permute.xlu0 %788
    %v791 = vmul.f32 %v789, %v785
    %793 = vrot.lane.b32.xlu0 %v730, 32
    %v794 = vpop.permute.xlu0 %793
    %v796 = vsub.f32 %v782, %v794
    %798 = vrot.lane.b32.xlu0 %v796, 96
    %v799 = vpop.permute.xlu0 %798
    %v801 = vmul.f32 %v791, %v799
    %v802 = vadd.f32 %v730, %v801
    %v803 = vpack.c.bf16 %v802, %v802
    %805 = vrot.lane.b32.xlu0 %v803, 96
    %v806 = vpop.permute.xlu0 %805
    %v808 = vsel %vm662, %v806, 0
    %810 = vmatpush.bf16.msra.mxu0 0
    %811 = vmatpush.bf16.msra.mxu0 0
    %812 = vmatpush.bf16.msra.mxu0 0
    %813 = vmatpush.bf16.msra.mxu0 0
    %814 = vmatpush.bf16.msra.mxu0 0
    %815 = vmatpush.bf16.msra.mxu0 0
    %816 = vmatpush.bf16.msra.mxu0 %v659
    %817 = vmatpush.bf16.msra.mxu0 %v658
    %818 = vmatmul.bf16.gmra.mxu0 %v808
    %v819 = vpop.f32.mrf.mxu0
    %v820 = vadd.f32 0.0, %v819
    %v821 = vpop.f32.mrf.mxu0
    %822 = vdwg.mxu0
    %v823 = vadd.f32 %v639, %v820
    %v824 = vxor.u32 %v823, 2147483648
    %v825 = vmul.f32 %v824, 1.442695
    %v826 = vpow.pop %v825
    %v827 = vadd.f32 %v826, 1.0
    %v828 = vrcp.pop %v827
    %v829 = vmul.f32 %v827, %v828
    %v830 = vsub.f32 1.0, %v829
    %v831 = vmul.f32 %v828, %v830
    %v832 = vadd.f32 %v828, %v831
    %vm833 = vweird.f32 %v827
    %vm834 = vweird.f32 %v828
    %vm835 = vmor %vm833, %vm834
    %v836 = vsel %vm835, %v828, %v832
    %v837 = vand.u32 2147483647, %v827
    %vm838 = vcmp.eq.f32.partialorder %v837, 8.507059e+37
    %v839 = vand.u32 %v827, 2147483648
    %v840 = vor.u32 1.1754944e-38, %v839
    %v841 = vsel %vm838, %v840, %v836
    %v842 = vmul.f32 1.0, %v841
    %v843 = vadd.f32 %v820, %v702
    %845 = vrot.lane.b32.xlu0 %v843, 64
    %v846 = vpop.permute.xlu0 %845
    %v848 = vmul.f32 %v842, %v846
    %850 = vrot.lane.b32.xlu0 %v848, 64
    %v851 = vpop.permute.xlu0 %850
    %v853 = vadd.f32 %v639, %v851
    %v854 = vtanh.pop %v853
    %vm855 = vcmp.gt.f32.partialorder %v649, 2.0
    %v856 = vsel %vm855, 1.0, 0.0
    %v857 = vsub.f32 1.0, %v842
    %859 = vset.pattern.permute.xlu0 0
    %860 = vperm.xlu0 %859, %v856
    %v861 = vpop.permute.xlu0 %860
    %v863 = vmul.f32 %v861, %v857
    %865 = vrot.lane.b32.xlu0 %v802, 32
    %v866 = vpop.permute.xlu0 %865
    %v868 = vsub.f32 %v854, %v866
    %870 = vrot.lane.b32.xlu0 %v868, 96
    %v871 = vpop.permute.xlu0 %870
    %v873 = vmul.f32 %v863, %v871
    %v874 = vadd.f32 %v802, %v873
    %v875 = vpack.c.bf16 %v874, %v874
    %877 = vrot.lane.b32.xlu0 %v875, 96
    %v878 = vpop.permute.xlu0 %877
    %v880 = vsel %vm662, %v878, 0
    %882 = vmatpush.bf16.msra.mxu0 0
    %883 = vmatpush.bf16.msra.mxu0 0
    %884 = vmatpush.bf16.msra.mxu0 0
    %885 = vmatpush.bf16.msra.mxu0 0
    %886 = vmatpush.bf16.msra.mxu0 0
    %887 = vmatpush.bf16.msra.mxu0 0
    %888 = vmatpush.bf16.msra.mxu0 %v659
    %889 = vmatpush.bf16.msra.mxu0 %v658
    %890 = vmatmul.bf16.gmra.mxu0 %v880
    %v891 = vpop.f32.mrf.mxu0
    %v892 = vadd.f32 0.0, %v891
    %v893 = vpop.f32.mrf.mxu0
    %894 = vdwg.mxu0
    %v895 = vadd.f32 %v640, %v892
    %v896 = vxor.u32 %v895, 2147483648
    %v897 = vmul.f32 %v896, 1.442695
    %v898 = vpow.pop %v897
    %v899 = vadd.f32 %v898, 1.0
    %v900 = vrcp.pop %v899
    %v901 = vmul.f32 %v899, %v900
    %v902 = vsub.f32 1.0, %v901
    %v903 = vmul.f32 %v900, %v902
    %v904 = vadd.f32 %v900, %v903
    %vm905 = vweird.f32 %v899
    %vm906 = vweird.f32 %v900
    %vm907 = vmor %vm905, %vm906
    %v908 = vsel %vm907, %v900, %v904
    %v909 = vand.u32 2147483647, %v899
    %vm910 = vcmp.eq.f32.partialorder %v909, 8.507059e+37
    %v911 = vand.u32 %v899, 2147483648
    %v912 = vor.u32 1.1754944e-38, %v911
    %v913 = vsel %vm910, %v912, %v908
    %v914 = vmul.f32 1.0, %v913
    %v915 = vadd.f32 %v892, %v702
    %917 = vrot.lane.b32.xlu0 %v915, 64
    %v918 = vpop.permute.xlu0 %917
    %v920 = vmul.f32 %v914, %v918
    %922 = vrot.lane.b32.xlu0 %v920, 64
    %v923 = vpop.permute.xlu0 %922
    %v925 = vadd.f32 %v640, %v923
    %v926 = vtanh.pop %v925
    %vm927 = vcmp.gt.f32.partialorder %v649, 3.0
    %v928 = vsel %vm927, 1.0, 0.0
    %v929 = vsub.f32 1.0, %v914
    %931 = vset.pattern.permute.xlu0 0
    %932 = vperm.xlu0 %931, %v928
    %v933 = vpop.permute.xlu0 %932
    %v935 = vmul.f32 %v933, %v929
    %937 = vrot.lane.b32.xlu0 %v874, 32
    %v938 = vpop.permute.xlu0 %937
    %v940 = vsub.f32 %v926, %v938
    %942 = vrot.lane.b32.xlu0 %v940, 96
    %v943 = vpop.permute.xlu0 %942
    %v945 = vmul.f32 %v935, %v943
    %v946 = vadd.f32 %v874, %v945
    %v947 = vpack.c.bf16 %v946, %v946
    %949 = vrot.lane.b32.xlu0 %v947, 96
    %v950 = vpop.permute.xlu0 %949
    %v952 = vsel %vm662, %v950, 0
    %954 = vmatpush.bf16.msra.mxu0 0
    %955 = vmatpush.bf16.msra.mxu0 0
    %956 = vmatpush.bf16.msra.mxu0 0
    %957 = vmatpush.bf16.msra.mxu0 0
    %958 = vmatpush.bf16.msra.mxu0 0
    %959 = vmatpush.bf16.msra.mxu0 0
    %960 = vmatpush.bf16.msra.mxu0 %v659
    %961 = vmatpush.bf16.msra.mxu0 %v658
    %962 = vmatmul.bf16.gmra.mxu0 %v952
    %v963 = vpop.f32.mrf.mxu0
    %v964 = vadd.f32 0.0, %v963
    %v965 = vpop.f32.mrf.mxu0
    %966 = vdwg.mxu0
    %v967 = vadd.f32 %v641, %v964
    %v968 = vxor.u32 %v967, 2147483648
    %v969 = vmul.f32 %v968, 1.442695
    %v970 = vpow.pop %v969
    %v971 = vadd.f32 %v970, 1.0
    %v972 = vrcp.pop %v971
    %v973 = vmul.f32 %v971, %v972
    %v974 = vsub.f32 1.0, %v973
    %v975 = vmul.f32 %v972, %v974
    %v976 = vadd.f32 %v972, %v975
    %vm977 = vweird.f32 %v971
    %vm978 = vweird.f32 %v972
    %vm979 = vmor %vm977, %vm978
    %v980 = vsel %vm979, %v972, %v976
    %v981 = vand.u32 2147483647, %v971
    %vm982 = vcmp.eq.f32.partialorder %v981, 8.507059e+37
    %v983 = vand.u32 %v971, 2147483648
    %v984 = vor.u32 1.1754944e-38, %v983
    %v985 = vsel %vm982, %v984, %v980
    %v986 = vmul.f32 1.0, %v985
    %v987 = vadd.f32 %v964, %v702
    %989 = vrot.lane.b32.xlu0 %v987, 64
    %v990 = vpop.permute.xlu0 %989
    %v992 = vmul.f32 %v986, %v990
    %994 = vrot.lane.b32.xlu0 %v992, 64
    %v995 = vpop.permute.xlu0 %994
    %v997 = vadd.f32 %v641, %v995
    %v998 = vtanh.pop %v997
    %vm999 = vcmp.gt.f32.partialorder %v649, 4.0
    %v1000 = vsel %vm999, 1.0, 0.0
    %v1001 = vsub.f32 1.0, %v986
    %1003 = vset.pattern.permute.xlu0 0
    %1004 = vperm.xlu0 %1003, %v1000
    %v1005 = vpop.permute.xlu0 %1004
    %v1007 = vmul.f32 %v1005, %v1001
    %1009 = vrot.lane.b32.xlu0 %v946, 32
    %v1010 = vpop.permute.xlu0 %1009
    %v1012 = vsub.f32 %v998, %v1010
    %1014 = vrot.lane.b32.xlu0 %v1012, 96
    %v1015 = vpop.permute.xlu0 %1014
    %v1017 = vmul.f32 %v1007, %v1015
    %v1018 = vadd.f32 %v946, %v1017
    %v1019 = vpack.c.bf16 %v1018, %v1018
    %1021 = vrot.lane.b32.xlu0 %v1019, 96
    %v1022 = vpop.permute.xlu0 %1021
    %v1024 = vsel %vm662, %v1022, 0
    %1026 = vmatpush.bf16.msra.mxu0 0
    %1027 = vmatpush.bf16.msra.mxu0 0
    %1028 = vmatpush.bf16.msra.mxu0 0
    %1029 = vmatpush.bf16.msra.mxu0 0
    %1030 = vmatpush.bf16.msra.mxu0 0
    %1031 = vmatpush.bf16.msra.mxu0 0
    %1032 = vmatpush.bf16.msra.mxu0 %v659
    %1033 = vmatpush.bf16.msra.mxu0 %v658
    %1034 = vmatmul.bf16.gmra.mxu0 %v1024
    %v1035 = vpop.f32.mrf.mxu0
    %v1036 = vadd.f32 0.0, %v1035
    %v1037 = vpop.f32.mrf.mxu0
    %1038 = vdwg.mxu0
    %v1039 = vadd.f32 %v642, %v1036
    %v1040 = vxor.u32 %v1039, 2147483648
    %v1041 = vmul.f32 %v1040, 1.442695
    %v1042 = vpow.pop %v1041
    %v1043 = vadd.f32 %v1042, 1.0
    %v1044 = vrcp.pop %v1043
    %v1045 = vmul.f32 %v1043, %v1044
    %v1046 = vsub.f32 1.0, %v1045
    %v1047 = vmul.f32 %v1044, %v1046
    %v1048 = vadd.f32 %v1044, %v1047
    %vm1049 = vweird.f32 %v1043
    %vm1050 = vweird.f32 %v1044
    %vm1051 = vmor %vm1049, %vm1050
    %v1052 = vsel %vm1051, %v1044, %v1048
    %v1053 = vand.u32 2147483647, %v1043
    %vm1054 = vcmp.eq.f32.partialorder %v1053, 8.507059e+37
    %v1055 = vand.u32 %v1043, 2147483648
    %v1056 = vor.u32 1.1754944e-38, %v1055
    %v1057 = vsel %vm1054, %v1056, %v1052
    %v1058 = vmul.f32 1.0, %v1057
    %v1059 = vadd.f32 %v1036, %v702
    %1061 = vrot.lane.b32.xlu0 %v1059, 64
    %v1062 = vpop.permute.xlu0 %1061
    %v1064 = vmul.f32 %v1058, %v1062
    %1066 = vrot.lane.b32.xlu0 %v1064, 64
    %v1067 = vpop.permute.xlu0 %1066
    %v1069 = vadd.f32 %v642, %v1067
    %v1070 = vtanh.pop %v1069
    %vm1071 = vcmp.gt.f32.partialorder %v649, 5.0
    %v1072 = vsel %vm1071, 1.0, 0.0
    %v1073 = vsub.f32 1.0, %v1058
    %1075 = vset.pattern.permute.xlu0 0
    %1076 = vperm.xlu0 %1075, %v1072
    %v1077 = vpop.permute.xlu0 %1076
    %v1079 = vmul.f32 %v1077, %v1073
    %1081 = vrot.lane.b32.xlu0 %v1018, 32
    %v1082 = vpop.permute.xlu0 %1081
    %v1084 = vsub.f32 %v1070, %v1082
    %1086 = vrot.lane.b32.xlu0 %v1084, 96
    %v1087 = vpop.permute.xlu0 %1086
    %v1089 = vmul.f32 %v1079, %v1087
    %v1090 = vadd.f32 %v1018, %v1089
    %v1091 = vpack.c.bf16 %v1090, %v1090
    %1093 = vrot.lane.b32.xlu0 %v1091, 96
    %v1094 = vpop.permute.xlu0 %1093
    %v1096 = vsel %vm662, %v1094, 0
    %1098 = vmatpush.bf16.msra.mxu0 0
    %1099 = vmatpush.bf16.msra.mxu0 0
    %1100 = vmatpush.bf16.msra.mxu0 0
    %1101 = vmatpush.bf16.msra.mxu0 0
    %1102 = vmatpush.bf16.msra.mxu0 0
    %1103 = vmatpush.bf16.msra.mxu0 0
    %1104 = vmatpush.bf16.msra.mxu0 %v659
    %1105 = vmatpush.bf16.msra.mxu0 %v658
    %1106 = vmatmul.bf16.gmra.mxu0 %v1096
    %v1107 = vpop.f32.mrf.mxu0
    %v1108 = vadd.f32 0.0, %v1107
    %v1109 = vpop.f32.mrf.mxu0
    %1110 = vdwg.mxu0
    %v1111 = vadd.f32 %v643, %v1108
    %v1112 = vxor.u32 %v1111, 2147483648
    %v1113 = vmul.f32 %v1112, 1.442695
    %v1114 = vpow.pop %v1113
    %v1115 = vadd.f32 %v1114, 1.0
    %v1116 = vrcp.pop %v1115
    %v1117 = vmul.f32 %v1115, %v1116
    %v1118 = vsub.f32 1.0, %v1117
    %v1119 = vmul.f32 %v1116, %v1118
    %v1120 = vadd.f32 %v1116, %v1119
    %vm1121 = vweird.f32 %v1115
    %vm1122 = vweird.f32 %v1116
    %vm1123 = vmor %vm1121, %vm1122
    %v1124 = vsel %vm1123, %v1116, %v1120
    %v1125 = vand.u32 2147483647, %v1115
    %vm1126 = vcmp.eq.f32.partialorder %v1125, 8.507059e+37
    %v1127 = vand.u32 %v1115, 2147483648
    %v1128 = vor.u32 1.1754944e-38, %v1127
    %v1129 = vsel %vm1126, %v1128, %v1124
    %v1130 = vmul.f32 1.0, %v1129
    %v1131 = vadd.f32 %v1108, %v702
    %1133 = vrot.lane.b32.xlu0 %v1131, 64
    %v1134 = vpop.permute.xlu0 %1133
    %v1136 = vmul.f32 %v1130, %v1134
    %1138 = vrot.lane.b32.xlu0 %v1136, 64
    %v1139 = vpop.permute.xlu0 %1138
    %v1141 = vadd.f32 %v643, %v1139
    %v1142 = vtanh.pop %v1141
    %vm1143 = vcmp.gt.f32.partialorder %v649, 6.0
    %v1144 = vsel %vm1143, 1.0, 0.0
    %v1145 = vsub.f32 1.0, %v1130
    %1147 = vset.pattern.permute.xlu0 0
    %1148 = vperm.xlu0 %1147, %v1144
    %v1149 = vpop.permute.xlu0 %1148
    %v1151 = vmul.f32 %v1149, %v1145
    %1153 = vrot.lane.b32.xlu0 %v1090, 32
    %v1154 = vpop.permute.xlu0 %1153
    %v1156 = vsub.f32 %v1142, %v1154
    %1158 = vrot.lane.b32.xlu0 %v1156, 96
    %v1159 = vpop.permute.xlu0 %1158
    %v1161 = vmul.f32 %v1151, %v1159
    %v1162 = vadd.f32 %v1090, %v1161
    %v1163 = vpack.c.bf16 %v1162, %v1162
    %1165 = vrot.lane.b32.xlu0 %v1163, 96
    %v1166 = vpop.permute.xlu0 %1165
    %v1168 = vsel %vm662, %v1166, 0
    %1170 = vmatpush.bf16.msra.mxu0 0
    %1171 = vmatpush.bf16.msra.mxu0 0
    %1172 = vmatpush.bf16.msra.mxu0 0
    %1173 = vmatpush.bf16.msra.mxu0 0
    %1174 = vmatpush.bf16.msra.mxu0 0
    %1175 = vmatpush.bf16.msra.mxu0 0
    %1176 = vmatpush.bf16.msra.mxu0 %v659
    %1177 = vmatpush.bf16.msra.mxu0 %v658
    %1178 = vmatmul.bf16.gmra.mxu0 %v1168
    %v1179 = vpop.f32.mrf.mxu0
    %v1180 = vadd.f32 0.0, %v1179
    %v1181 = vpop.f32.mrf.mxu0
    %1182 = vdwg.mxu0
    %v1183 = vadd.f32 %v644, %v1180
    %v1184 = vxor.u32 %v1183, 2147483648
    %v1185 = vmul.f32 %v1184, 1.442695
    %v1186 = vpow.pop %v1185
    %v1187 = vadd.f32 %v1186, 1.0
    %v1188 = vrcp.pop %v1187
    %v1189 = vmul.f32 %v1187, %v1188
    %v1190 = vsub.f32 1.0, %v1189
    %v1191 = vmul.f32 %v1188, %v1190
    %v1192 = vadd.f32 %v1188, %v1191
    %vm1193 = vweird.f32 %v1187
    %vm1194 = vweird.f32 %v1188
    %vm1195 = vmor %vm1193, %vm1194
    %v1196 = vsel %vm1195, %v1188, %v1192
    %v1197 = vand.u32 2147483647, %v1187
    %vm1198 = vcmp.eq.f32.partialorder %v1197, 8.507059e+37
    %v1199 = vand.u32 %v1187, 2147483648
    %v1200 = vor.u32 1.1754944e-38, %v1199
    %v1201 = vsel %vm1198, %v1200, %v1196
    %v1202 = vmul.f32 1.0, %v1201
    %v1203 = vadd.f32 %v1180, %v702
    %1205 = vrot.lane.b32.xlu0 %v1203, 64
    %v1206 = vpop.permute.xlu0 %1205
    %v1208 = vmul.f32 %v1202, %v1206
    %1210 = vrot.lane.b32.xlu0 %v1208, 64
    %v1211 = vpop.permute.xlu0 %1210
    %v1213 = vadd.f32 %v644, %v1211
    %v1214 = vtanh.pop %v1213
    %vm1215 = vcmp.gt.f32.partialorder %v649, 7.0
    %v1216 = vsel %vm1215, 1.0, 0.0
    %v1217 = vsub.f32 1.0, %v1202
    %1219 = vset.pattern.permute.xlu0 0
    %1220 = vperm.xlu0 %1219, %v1216
    %v1221 = vpop.permute.xlu0 %1220
    %v1223 = vmul.f32 %v1221, %v1217
    %1225 = vrot.lane.b32.xlu0 %v1162, 32
    %v1226 = vpop.permute.xlu0 %1225
    %v1228 = vsub.f32 %v1214, %v1226
    %1230 = vrot.lane.b32.xlu0 %v1228, 96
    %v1231 = vpop.permute.xlu0 %1230
    %v1233 = vmul.f32 %v1223, %v1231
    %v1234 = vadd.f32 %v1162, %v1233
    %v1235 = vpack.c.bf16 %v1234, %v1234
    %v1236 = vld [vmem:[%s6] sm:$0xf]
    %v1237 = vld [vmem:[%s6 + $0x4] sm:$0xf]
    %v1238 = vld [vmem:[%s6 + $0x8] sm:$0xf]
    %v1239 = vld [vmem:[%s6 + $0xc] sm:$0xf]
    %v1240 = vld [vmem:[%s6 + $0x10] sm:$0xf]
    %v1241 = vld [vmem:[%s6 + $0x14] sm:$0xf]
    %v1244 = vunpack.c.l.b16 %v1240
    %v1245 = vunpack.c.l.b16 %v1241
    %v1246 = vpack.c.b16 %v1245, %v1244
    %v1249 = vsel %vm594, %v485, 0
    %1251 = vmatpush.bf16.msra.mxu0 0
    %1252 = vmatpush.bf16.msra.mxu0 0
    %1253 = vmatpush.bf16.msra.mxu0 0
    %1254 = vmatpush.bf16.msra.mxu0 0
    %1255 = vmatpush.bf16.msra.mxu0 0
    %1256 = vmatpush.bf16.msra.mxu0 0
    %1257 = vmatpush.bf16.msra.mxu0 0
    %1258 = vmatpush.bf16.msra.mxu0 %v1246
    %1259 = vmatmul.bf16.gmra.mxu0 %v1249
    %v1260 = vpop.f32.mrf.mxu0
    %v1261 = vadd.f32 0.0, %v1260
    %v1262 = vpop.f32.mrf.mxu0
    %1263 = vdwg.mxu0
    %1265 = vrot.lane.b32.xlu0 %v1235, 96
    %v1266 = vpop.permute.xlu0 %1265
    %v1271 = vunpack.c.l.b16 %v1236
    %v1272 = vunpack.c.l.b16 %v1237
    %v1273 = vunpack.c.l.b16 %v1238
    %v1274 = vunpack.c.l.b16 %v1239
    %v1275 = vpack.c.b16 %v1272, %v1271
    %v1276 = vpack.c.b16 %v1274, %v1273
    %v1280 = vsel %vm662, %v1266, 0
    %1282 = vmatpush.bf16.msra.mxu0 0
    %1283 = vmatpush.bf16.msra.mxu0 0
    %1284 = vmatpush.bf16.msra.mxu0 0
    %1285 = vmatpush.bf16.msra.mxu0 0
    %1286 = vmatpush.bf16.msra.mxu0 0
    %1287 = vmatpush.bf16.msra.mxu0 0
    %1288 = vmatpush.bf16.msra.mxu0 %v1276
    %1289 = vmatpush.bf16.msra.mxu0 %v1275
    %1290 = vmatmul.bf16.gmra.mxu0 %v1280
    %v1291 = vpop.f32.mrf.mxu0
    %v1292 = vadd.f32 %v1261, %v1291
    %v1293 = vpop.f32.mrf.mxu0
    %1294 = vdwg.mxu0
    %v1295 = vperm.slane %v498, 3
    %v1296 = vadd.f32 %v1292, %v1295
    %v1297 = vld [vmem:[%s6 + $0x18] sm:$0xf]
    %v1298 = vld [vmem:[%s6 + $0x1c] sm:$0xf]
    %v1303 = vunpack.c.l.b16 %v486
    %v1304 = vunpack.c.l.b16 %v487
    %v1305 = vunpack.c.l.b16 %v488
    %v1306 = vunpack.c.l.b16 %v489
    %v1307 = vpack.c.b16 %v1304, %v1303
    %v1308 = vpack.c.b16 %v1306, %v1305
    %v1311 = vunpack.c.l.b16 %v1297
    %v1312 = vunpack.c.l.b16 %v1298
    %v1313 = vpack.c.b16 %v1312, %v1311
    %v1316 = vsel %vm594, %v1307, 0
    %v1319 = vsel %vm594, %v1308, 0
    %1321 = vmatpush.bf16.msra.mxu0 0
    %1322 = vmatpush.bf16.msra.mxu0 0
    %1323 = vmatpush.bf16.msra.mxu0 0
    %1324 = vmatpush.bf16.msra.mxu0 0
    %1325 = vmatpush.bf16.msra.mxu0 0
    %1326 = vmatpush.bf16.msra.mxu0 0
    %1327 = vmatpush.bf16.msra.mxu0 0
    %1328 = vmatpush.bf16.msra.mxu0 %v1313
    %1329 = vmatmul.bf16.gmra.mxu0 %v1316
    %v1330 = vpop.f32.mrf.mxu0
    %v1331 = vadd.f32 0.0, %v1330
    %v1332 = vpop.f32.mrf.mxu0
    %v1333 = vadd.f32 0.0, %v1332
    %1334 = vmatmul.bf16.gmra.mxu0 %v1319
    %v1335 = vpop.f32.mrf.mxu0
    %v1336 = vadd.f32 0.0, %v1335
    %v1337 = vpop.f32.mrf.mxu0
    %v1338 = vadd.f32 0.0, %v1337
    %1339 = vdwg.mxu0
    %v1340 = vld [vmem:[%s3] sm:$0x3]
    %v1341 = vperm.slane %v1340, 0
    %v1342 = vlaneseq
    %v1343 = vshrl.u32 %v1342, 7
    %1345 = vset.pattern.permute.xlu0 %v1343
    %1346 = vperm.xlu0 %1345, %v1341
    %v1347 = vpop.permute.xlu0 %1346
    %v1348 = vlaneseq
    %v1349 = vshrl.u32 %v1348, 7
    %v1350 = vadd.s32 %v1349, 8
    %1351 = vset.pattern.permute.xlu0 %v1350
    %1352 = vperm.xlu0 %1351, %v1341
    %v1353 = vpop.permute.xlu0 %1352
    %v1354 = vperm.slane %v1340, 1
    %v1355 = vlaneseq
    %v1356 = vshrl.u32 %v1355, 7
    %1358 = vset.pattern.permute.xlu0 %v1356
    %1359 = vperm.xlu0 %1358, %v1354
    %v1360 = vpop.permute.xlu0 %1359
    %v1361 = vlaneseq
    %v1362 = vshrl.u32 %v1361, 7
    %v1363 = vadd.s32 %v1362, 8
    %1364 = vset.pattern.permute.xlu0 %v1363
    %1365 = vperm.xlu0 %1364, %v1354
    %v1366 = vpop.permute.xlu0 %1365
    %v1368 = vrot.slane %v1296, 1
    %v1369 = vperm.slane %v1296, 0
    %v1370 = vperm.slane %v1368, 0
    %v1373 = vadd.f32 %v1331, %v1369
    %v1374 = vadd.f32 %v1333, %v1369
    %v1375 = vadd.f32 %v1336, %v1370
    %v1376 = vadd.f32 %v1338, %v1370
    %v1377 = vperm.slane %v498, 2
    %v1378 = vmul.f32 %v1347, %v1377
    %v1379 = vmul.f32 %v1353, %v1377
    %v1380 = vmul.f32 %v1360, %v1377
    %v1381 = vmul.f32 %v1366, %v1377
    %v1382 = vadd.f32 %v1373, %v1378
    %v1383 = vadd.f32 %v1374, %v1379
    %v1384 = vadd.f32 %v1375, %v1380
    %v1385 = vadd.f32 %v1376, %v1381
    %v1386 = vmax.f32 %v1382, 0.0
    %v1387 = vmax.f32 %v1383, 0.0
    %v1388 = vmax.f32 %v1384, 0.0
    %v1389 = vmax.f32 %v1385, 0.0
    %s1390 = sld [smem:[#allocation2]]
    %vm1391 = vcmp.lt.s32.totalorder %v66, 32
    %s1392 = ssub.f32 1.0, %s1390
    %v1393 = vstv %s1392
    %v1394 = vstv %s1390
    %v1395 = vsel %vm1391, %v1393, %v1394
    %v1396 = vmul.f32 %v498, %v1395
    %s1397 = sld [smem:[#allocation2 + $0x1]]
    %s1398 = smul.f32 %s1392, %s1397
    %s1399 = sld [smem:[#allocation2 + $0x2]]
    %s1400 = smul.f32 %s1390, %s1399
    %s1401 = sadd.f32 %s1398, %s1400
    %v1402 = vperm.slane %v1396, 4
    %v1403 = vmul.f32 %v1386, %v1402
    %v1404 = vmul.f32 %v1387, %v1402
    %v1405 = vmul.f32 %v1388, %v1402
    %v1406 = vmul.f32 %v1389, %v1402
    %vm1407 = vcmask 523264
    %v1408 = vsel %vm1407, %v1403, 0.0
    %1409 = vadd.xlane.f32.xlu0 %v1408
    %v1410 = vpop.xlane.xlu0 %1409
    %v1411 = vsel %vm1407, %v1404, 0.0
    %1412 = vadd.xlane.f32.xlu0 %v1411
    %v1413 = vpop.xlane.xlu0 %1412
    %v1414 = vsel %vm1407, %v1405, 0.0
    %1415 = vadd.xlane.f32.xlu0 %v1414
    %v1416 = vpop.xlane.xlu0 %1415
    %v1417 = vsel %vm1407, %v1406, 0.0
    %1418 = vadd.xlane.f32.xlu0 %v1417
    %v1419 = vpop.xlane.xlu0 %1418
    %v1420 = vstv %s1401
    %v1421 = vadd.f32 %v1410, %v1420
    %v1422 = vadd.f32 %v1413, %v1420
    %v1423 = vadd.f32 %v1416, %v1420
    %v1424 = vadd.f32 %v1419, %v1420
    %v1429 = vperm.slane %v1421, %v66
    %v1430 = vadd.s32 %v66, 4294967288
    %v1431 = vperm.slane %v1422, %v1430
    %vm1432 = vcmask 130112
    %v1433 = vsel %vm1432, %v1431, %v1429
    %v1434 = vperm.slane %v1423, %v66
    %v1435 = vperm.slane %v1424, %v1430
    %v1436 = vsel %vm1432, %v1435, %v1434
    %vm1437 = vcmask 1041409
    %v1438 = vsel %vm1437, %v1436, %v1433
    %vm1440 = vcmask 123904
    %1441 = vst.msk [vmem:[#allocation5] sm:$0x3] %vm1440, %v1438
    // Predicated region
    $region38: #{generator_v4_forward.1} parent=1 // pred_check
      _
    $region39: #{generator_v4_forward.1} parent=1 // pred_check_branch
      %1443 = sbr.rel (0) target = $region41
    $region40: #{generator_v4_forward.1} parent=1 // pred_region
      %1445 = vsyncadd [#allocation3], 0
      %s1447 = sshll.u32 [#allocation5], 4
      %s1448 = int_to_ptr.vmem [resolvable:$true] %s1447
      %s1449 = sshll.u32 %s8, 4
      %s1450 = int_to_ptr.hbm [resolvable:$true] %s1449
      %1452 = dma.vmem_to_hbm [thread:$0]  %s1448, 32, %s1450, [#allocation3]
    $region41: #{generator_v4_forward.1} parent=1 // pred_fallthru
      _
    // Predicated region
    $region42: #{generator_v4_forward.1} parent=1 // pred_check
      _
    $region43: #{generator_v4_forward.1} parent=1 // pred_check_branch
      %1454 = sbr.rel (0) target = $region45
    $region44: #{generator_v4_forward.1} parent=1 // pred_region
      %1456 = dma.done [#allocation3], 32
    $region45: #{generator_v4_forward.1} parent=1 // pred_fallthru
      _
    %1457 = vsyncpa [#allocation3], 1
    %1458 = vsyncpa [#allocation4], 1

</llo_original>
